<compile_context>
chip_gen: v5e
topology: v5e:2x2
jax: 0.10.0
libtpu: 0.0.40
codegen_flags: <defaults>
</compile_context>

<pallas_src>
import functools

import jax
import jax.numpy as jnp
from jax import lax
from jax.experimental import pallas as pl
from jax.experimental.pallas import tpu as pltpu


def _layernorm(x, gamma, beta, eps):
    mu = jnp.mean(x, axis=-1, keepdims=True)
    xc = x - mu
    var = jnp.mean(xc * xc, axis=-1, keepdims=True)
    return xc * lax.rsqrt(var + eps) * gamma + beta


def _gelu_tanh(x):
    c = 0.7978845608028654  # sqrt(2/pi)
    return 0.5 * x * (1.0 + jnp.tanh(c * (x + 0.044715 * x * x * x)))


def encoder_kernel(x_ref, ln1_g_ref, ln1_b_ref, wqkv_ref, bqkv_ref,
                   wo_ref, bo_ref, ln2_g_ref, ln2_b_ref,
                   w1_ref, b1_ref, w2_ref, b2_ref, out_ref,
                   *, num_heads, head_dim, dim, scale, eps):
    x = x_ref[0]  # (S, D)

    # ---- LayerNorm 1 ----
    h = _layernorm(x, ln1_g_ref[...], ln1_b_ref[...], eps)

    # ---- fused QKV projection: single D-wide MXU contraction ----
    qkv = jnp.dot(h, wqkv_ref[...],
                  preferred_element_type=jnp.float32) + bqkv_ref[...]   # (S, 3D)

    wo = wo_ref[...]  # (D, D) pre-transposed: rows = concat-head feature

    # ---- per-head attention, output projection accumulated per head ----
    acc = None
    for hi in range(num_heads):                        # static unrolled loop
        lo = hi * head_dim
        q = qkv[:, lo:lo + head_dim] * scale           # scale folded into q
        k = qkv[:, dim + lo:dim + lo + head_dim]
        v = qkv[:, 2 * dim + lo:2 * dim + lo + head_dim]
        # q @ k.T with no in-kernel transpose (contract last dims of both)
        s = lax.dot_general(q, k, (((1,), (1,)), ((), ())),
                            preferred_element_type=jnp.float32)         # (S, S)
        s = s - jnp.max(s, axis=-1, keepdims=True)
        e = jnp.exp(s)
        denom = jnp.sum(e, axis=-1, keepdims=True)
        r = pl.reciprocal(denom, approx=True)          # EUP
        r = r * (2.0 - denom * r)                      # one Newton step
        p = e * r
        oh = jnp.dot(p, v, preferred_element_type=jnp.float32)          # (S, hd)
        contrib = jnp.dot(oh, wo[lo:lo + head_dim, :],
                          preferred_element_type=jnp.float32)           # (S, D)
        acc = contrib if acc is None else acc + contrib

    attn = acc + bo_ref[...]
    res1 = attn + x                                    # residual 1

    # ---- LayerNorm 2 + MLP ----
    h2 = _layernorm(res1, ln2_g_ref[...], ln2_b_ref[...], eps)
    m1 = jnp.dot(h2, w1_ref[...],
                 preferred_element_type=jnp.float32) + b1_ref[...]      # (S, M)
    g = _gelu_tanh(m1)
    m2 = jnp.dot(g, w2_ref[...],
                 preferred_element_type=jnp.float32) + b2_ref[...]      # (S, D)

    out_ref[0] = (m2 + res1).astype(out_ref.dtype)     # residual 2


def transformer_encoder(x, params, num_heads, *, eps=1e-5):
    B, S, D = x.shape
    head_dim = D // num_heads
    (ln1_g, ln1_b, wqkv_t, bqkv, wo_t, bo,
     ln2_g, ln2_b, w1_t, b1, w2_t, b2) = params
    M = w1_t.shape[1]
    scale = float(D) ** -0.5   # PyTorch: dim ** -0.5 (full dim)

    kernel = functools.partial(encoder_kernel, num_heads=num_heads,
                               head_dim=head_dim, dim=D, scale=scale, eps=eps)

    const2d = lambda b: (0, 0)   # constant index map: weights DMA'd once

    return pl.pallas_call(
        kernel,
        out_shape=jax.ShapeDtypeStruct((B, S, D), x.dtype),
        grid_spec=pltpu.PrefetchScalarGridSpec(
            num_scalar_prefetch=0,
            grid=(B,),
            in_specs=[
                pl.BlockSpec((1, S, D), lambda b: (b, 0, 0)),   # x
                pl.BlockSpec((1, D), const2d),                  # ln1 gamma
                pl.BlockSpec((1, D), const2d),                  # ln1 beta
                pl.BlockSpec((D, 3 * D), const2d),              # Wqkv^T  (in,out)
                pl.BlockSpec((1, 3 * D), const2d),              # bqkv
                pl.BlockSpec((D, D), const2d),                  # Wo^T    (in,out)
                pl.BlockSpec((1, D), const2d),                  # bo
                pl.BlockSpec((1, D), const2d),                  # ln2 gamma
                pl.BlockSpec((1, D), const2d),                  # ln2 beta
                pl.BlockSpec((D, M), const2d),                  # W1^T    (in,out)
                pl.BlockSpec((1, M), const2d),                  # b1
                pl.BlockSpec((M, D), const2d),                  # W2^T    (in,out)
                pl.BlockSpec((1, D), const2d),                  # b2
            ],
            out_specs=pl.BlockSpec((1, S, D), lambda b: (b, 0, 0)),
        ),
        compiler_params=pltpu.CompilerParams(
            dimension_semantics=("parallel",)),
    )(x, ln1_g, ln1_b, wqkv_t, bqkv, wo_t, bo, ln2_g, ln2_b, w1_t, b1, w2_t, b2)


def init_params(key, dim, mlp_dim, num_heads):
    ks = jax.random.split(key, 3)

    def xavier(k, shape):  # PyTorch (out, in) convention
        bnd = (6.0 / (shape[0] + shape[1])) ** 0.5
        return jax.random.uniform(k, shape, jnp.float32, -bnd, bnd)

    def torch_linear(kw, kb, out_f, in_f):
        bnd = 1.0 / (in_f ** 0.5)
        w = jax.random.uniform(kw, (out_f, in_f), jnp.float32, -bnd, bnd)
        b = jax.random.uniform(kb, (out_f,), jnp.float32, -bnd, bnd)
        return w, b

    ln1_g = jnp.ones((1, dim), jnp.float32)
    ln1_b = jnp.zeros((1, dim), jnp.float32)
    ln2_g = jnp.ones((1, dim), jnp.float32)
    ln2_b = jnp.zeros((1, dim), jnp.float32)

    wqkv = xavier(ks[0], (3 * dim, dim))          # xavier_uniform, zero bias
    bqkv = jnp.zeros((3 * dim,), jnp.float32)
    wo = xavier(ks[1], (dim, dim))
    bo = jnp.zeros((dim,), jnp.float32)
    k1w, k1b, k2w, k2b = jax.random.split(ks[2], 4)
    w1, b1 = torch_linear(k1w, k1b, mlp_dim, dim)  # default nn.Linear init
    w2, b2 = torch_linear(k2w, k2b, dim, mlp_dim)

    # Kernel-ready layout: pre-transposed weights (in, out) -> no in-kernel .T,
    # and 2-D (1, out) biases for lane-friendly hoisted broadcast adds.
    return (ln1_g, ln1_b,
            wqkv.T, bqkv.reshape(1, -1),
            wo.T, bo.reshape(1, -1),
            ln2_g, ln2_b,
            w1.T, b1.reshape(1, -1),
            w2.T, b2.reshape(1, -1))


def reference(x, params, num_heads, *, eps=1e-5):
    """Pure-JAX reference mirroring the PyTorch forward (dropout = identity)."""
    (ln1_g, ln1_b, wqkv_t, bqkv, wo_t, bo,
     ln2_g, ln2_b, w1_t, b1, w2_t, b2) = params
    B, S, D = x.shape
    hd = D // num_heads
    scale = float(D) ** -0.5

    def ln(v, g, bta):
        mu = jnp.mean(v, -1, keepdims=True)
        var = jnp.mean((v - mu) ** 2, -1, keepdims=True)
        return (v - mu) / jnp.sqrt(var + eps) * g + bta

    h = ln(x, ln1_g, ln1_b)
    qkv = h @ wqkv_t + bqkv                                    # (B, S, 3D)
    q, k, v = qkv[..., :D], qkv[..., D:2 * D], qkv[..., 2 * D:]
    q = q.reshape(B, S, num_heads, hd).transpose(0, 2, 1, 3)
    k = k.reshape(B, S, num_heads, hd).transpose(0, 2, 1, 3)
    v = v.reshape(B, S, num_heads, hd).transpose(0, 2, 1, 3)
    dots = jnp.einsum('bhid,bhjd->bhij', q, k) * scale
    attn = jax.nn.softmax(dots, axis=-1)
    o = jnp.einsum('bhij,bhjd->bhid', attn, v)
    o = o.transpose(0, 2, 1, 3).reshape(B, S, D)
    o = o @ wo_t + bo
    res1 = o + x
    h2 = ln(res1, ln2_g, ln2_b)
    m = jax.nn.gelu(h2 @ w1_t + b1, approximate=True)
    return m @ w2_t + b2 + res1


if __name__ == "__main__":
    B, S, D, H, MLP = 2, 8, 32, 4, 64
    key = jax.random.PRNGKey(0)
    kx, kp = jax.random.split(key)
    x = jax.random.normal(kx, (B, S, D), jnp.float32)
    params = init_params(kp, D, MLP, H)

    out = transformer_encoder(x, params, H)
    out = jax.block_until_ready(out)

    ref = reference(x, params, H)
    assert out.shape == (B, S, D)
    assert jnp.allclose(out, ref, atol=1e-3, rtol=1e-3), \
        float(jnp.max(jnp.abs(out - ref)))
    print("KERNEL_OK")
</pallas_src>

<mosaic_0001>
module attributes {stable_mosaic.version = 11 : i64} {
  func.func @encoder_kernel(%arg0: i32, %arg1: memref<1x8x32xf32, #tpu.memory_space<vmem>>, %arg2: memref<1x32xf32, #tpu.memory_space<vmem>>, %arg3: memref<1x32xf32, #tpu.memory_space<vmem>>, %arg4: memref<32x96xf32, #tpu.memory_space<vmem>>, %arg5: memref<1x96xf32, #tpu.memory_space<vmem>>, %arg6: memref<32x32xf32, #tpu.memory_space<vmem>>, %arg7: memref<1x32xf32, #tpu.memory_space<vmem>>, %arg8: memref<1x32xf32, #tpu.memory_space<vmem>>, %arg9: memref<1x32xf32, #tpu.memory_space<vmem>>, %arg10: memref<32x64xf32, #tpu.memory_space<vmem>>, %arg11: memref<1x64xf32, #tpu.memory_space<vmem>>, %arg12: memref<64x32xf32, #tpu.memory_space<vmem>>, %arg13: memref<1x32xf32, #tpu.memory_space<vmem>>, %arg14: memref<1x8x32xf32, #tpu.memory_space<vmem>>) attributes {dimension_semantics = [#tpu.dimension_semantics<parallel>], iteration_bounds = array<i64: 2>, scalar_prefetch = 0 : i64, scratch_operands = 0 : i64, tpu.core_type = #tpu.core_type<tc>, window_params = [{transform_indices = @transform_0, window_bounds = array<i64: 1, 8, 32>}, {pipeline_mode = #tpu.pipeline_mode<synchronous>, transform_indices = @transform_1, window_bounds = array<i64: 1, 32>}, {pipeline_mode = #tpu.pipeline_mode<synchronous>, transform_indices = @transform_2, window_bounds = array<i64: 1, 32>}, {pipeline_mode = #tpu.pipeline_mode<synchronous>, transform_indices = @transform_3, window_bounds = array<i64: 32, 96>}, {pipeline_mode = #tpu.pipeline_mode<synchronous>, transform_indices = @transform_4, window_bounds = array<i64: 1, 96>}, {pipeline_mode = #tpu.pipeline_mode<synchronous>, transform_indices = @transform_5, window_bounds = array<i64: 32, 32>}, {pipeline_mode = #tpu.pipeline_mode<synchronous>, transform_indices = @transform_6, window_bounds = array<i64: 1, 32>}, {pipeline_mode = #tpu.pipeline_mode<synchronous>, transform_indices = @transform_7, window_bounds = array<i64: 1, 32>}, {pipeline_mode = #tpu.pipeline_mode<synchronous>, transform_indices = @transform_8, window_bounds = array<i64: 1, 32>}, {pipeline_mode = #tpu.pipeline_mode<synchronous>, transform_indices = @transform_9, window_bounds = array<i64: 32, 64>}, {pipeline_mode = #tpu.pipeline_mode<synchronous>, transform_indices = @transform_10, window_bounds = array<i64: 1, 64>}, {pipeline_mode = #tpu.pipeline_mode<synchronous>, transform_indices = @transform_11, window_bounds = array<i64: 64, 32>}, {pipeline_mode = #tpu.pipeline_mode<synchronous>, transform_indices = @transform_12, window_bounds = array<i64: 1, 32>}, {transform_indices = @transform_13, window_bounds = array<i64: 1, 8, 32>}]} {
    %c0 = arith.constant 0 : index
    %c0_0 = arith.constant 0 : index
    %c0_1 = arith.constant 0 : index
    %0 = vector.load %arg1[%c0, %c0_0, %c0_1] : memref<1x8x32xf32, #tpu.memory_space<vmem>>, vector<1x8x32xf32>
    %1 = vector.shape_cast %0 : vector<1x8x32xf32> to vector<8x32xf32>
    %c0_2 = arith.constant 0 : index
    %c0_3 = arith.constant 0 : index
    %2 = vector.load %arg2[%c0_2, %c0_3] : memref<1x32xf32, #tpu.memory_space<vmem>>, vector<1x32xf32>
    %c0_4 = arith.constant 0 : index
    %c0_5 = arith.constant 0 : index
    %3 = vector.load %arg3[%c0_4, %c0_5] : memref<1x32xf32, #tpu.memory_space<vmem>>, vector<1x32xf32>
    %cst = arith.constant dense<0.000000e+00> : vector<8xf32>
    %4 = vector.multi_reduction <add>, %1, %cst [1] : vector<8x32xf32> to vector<8xf32>
    %5 = vector.shape_cast %4 : vector<8xf32> to vector<8x1xf32>
    %cst_6 = arith.constant 3.200000e+01 : f32
    %6 = vector.broadcast %cst_6 : f32 to vector<8x1xf32>
    %7 = arith.divf %5, %6 : vector<8x1xf32>
    %8 = vector.broadcast %7 : vector<8x1xf32> to vector<8x32xf32>
    %9 = arith.subf %1, %8 : vector<8x32xf32>
    %10 = arith.mulf %9, %9 : vector<8x32xf32>
    %cst_7 = arith.constant dense<0.000000e+00> : vector<8xf32>
    %11 = vector.multi_reduction <add>, %10, %cst_7 [1] : vector<8x32xf32> to vector<8xf32>
    %12 = vector.shape_cast %11 : vector<8xf32> to vector<8x1xf32>
    %cst_8 = arith.constant 3.200000e+01 : f32
    %13 = vector.broadcast %cst_8 : f32 to vector<8x1xf32>
    %14 = arith.divf %12, %13 : vector<8x1xf32>
    %cst_9 = arith.constant 9.99999974E-6 : f32
    %15 = vector.broadcast %cst_9 : f32 to vector<8x1xf32>
    %16 = arith.addf %14, %15 : vector<8x1xf32>
    %17 = math.rsqrt %16 : vector<8x1xf32>
    %18 = vector.broadcast %17 : vector<8x1xf32> to vector<8x32xf32>
    %19 = arith.mulf %9, %18 : vector<8x32xf32>
    %20 = vector.broadcast %2 : vector<1x32xf32> to vector<8x32xf32>
    %21 = arith.mulf %19, %20 : vector<8x32xf32>
    %22 = vector.broadcast %3 : vector<1x32xf32> to vector<8x32xf32>
    %23 = arith.addf %21, %22 : vector<8x32xf32>
    %c0_10 = arith.constant 0 : index
    %c0_11 = arith.constant 0 : index
    %24 = vector.load %arg4[%c0_10, %c0_11] : memref<32x96xf32, #tpu.memory_space<vmem>>, vector<32x96xf32>
    %cst_12 = arith.constant dense<0.000000e+00> : vector<8x96xf32>
    %25 = tpu.matmul %23, %24, %cst_12 {dimension_numbers = #tpu.dot_dimension_numbers<[1], [0], [0], [1], [0, 0, 1, 1], [], []>} : vector<8x32xf32>, vector<32x96xf32>, vector<8x96xf32> -> vector<8x96xf32>
    %c0_13 = arith.constant 0 : index
    %c0_14 = arith.constant 0 : index
    %26 = vector.load %arg5[%c0_13, %c0_14] : memref<1x96xf32, #tpu.memory_space<vmem>>, vector<1x96xf32>
    %27 = vector.broadcast %26 : vector<1x96xf32> to vector<8x96xf32>
    %28 = arith.addf %25, %27 : vector<8x96xf32>
    %c0_15 = arith.constant 0 : index
    %c0_16 = arith.constant 0 : index
    %29 = vector.load %arg6[%c0_15, %c0_16] : memref<32x32xf32, #tpu.memory_space<vmem>>, vector<32x32xf32>
    %30 = vector.extract_strided_slice %28 {offsets = [0, 0], sizes = [8, 8], strides = [1, 1]} : vector<8x96xf32> to vector<8x8xf32>
    %cst_17 = arith.constant 0.176776692 : f32
    %31 = vector.broadcast %cst_17 : f32 to vector<8x8xf32>
    %32 = arith.mulf %30, %31 : vector<8x8xf32>
    %33 = vector.extract_strided_slice %28 {offsets = [0, 32], sizes = [8, 8], strides = [1, 1]} : vector<8x96xf32> to vector<8x8xf32>
    %34 = vector.extract_strided_slice %28 {offsets = [0, 64], sizes = [8, 8], strides = [1, 1]} : vector<8x96xf32> to vector<8x8xf32>
    %cst_18 = arith.constant dense<0.000000e+00> : vector<8x8xf32>
    %35 = tpu.matmul %32, %33, %cst_18 {dimension_numbers = #tpu.dot_dimension_numbers<[1], [1], [0], [0], [0, 0, 1, 0], [], []>} : vector<8x8xf32>, vector<8x8xf32>, vector<8x8xf32> -> vector<8x8xf32>
    %cst_19 = arith.constant dense<0xFF800000> : vector<8xf32>
    %36 = vector.multi_reduction <maximumf>, %35, %cst_19 [1] : vector<8x8xf32> to vector<8xf32>
    %37 = vector.shape_cast %36 : vector<8xf32> to vector<8x1xf32>
    %38 = vector.broadcast %37 : vector<8x1xf32> to vector<8x8xf32>
    %39 = arith.subf %35, %38 : vector<8x8xf32>
    %40 = math.exp %39 : vector<8x8xf32>
    %cst_20 = arith.constant dense<0.000000e+00> : vector<8xf32>
    %41 = vector.multi_reduction <add>, %40, %cst_20 [1] : vector<8x8xf32> to vector<8xf32>
    %42 = vector.shape_cast %41 : vector<8xf32> to vector<8x1xf32>
    %43 = tpu.reciprocal %42 {approx = true} : vector<8x1xf32> -> vector<8x1xf32>
    %44 = arith.mulf %42, %43 : vector<8x1xf32>
    %cst_21 = arith.constant 2.000000e+00 : f32
    %45 = vector.broadcast %cst_21 : f32 to vector<8x1xf32>
    %46 = arith.subf %45, %44 : vector<8x1xf32>
    %47 = arith.mulf %43, %46 : vector<8x1xf32>
    %48 = vector.broadcast %47 : vector<8x1xf32> to vector<8x8xf32>
    %49 = arith.mulf %40, %48 : vector<8x8xf32>
    %cst_22 = arith.constant dense<0.000000e+00> : vector<8x8xf32>
    %50 = tpu.matmul %49, %34, %cst_22 {dimension_numbers = #tpu.dot_dimension_numbers<[1], [0], [0], [1], [0, 0, 1, 1], [], []>} : vector<8x8xf32>, vector<8x8xf32>, vector<8x8xf32> -> vector<8x8xf32>
    %51 = vector.extract_strided_slice %29 {offsets = [0, 0], sizes = [8, 32], strides = [1, 1]} : vector<32x32xf32> to vector<8x32xf32>
    %cst_23 = arith.constant dense<0.000000e+00> : vector<8x32xf32>
    %52 = tpu.matmul %50, %51, %cst_23 {dimension_numbers = #tpu.dot_dimension_numbers<[1], [0], [0], [1], [0, 0, 1, 1], [], []>} : vector<8x8xf32>, vector<8x32xf32>, vector<8x32xf32> -> vector<8x32xf32>
    %53 = vector.extract_strided_slice %28 {offsets = [0, 8], sizes = [8, 8], strides = [1, 1]} : vector<8x96xf32> to vector<8x8xf32>
    %cst_24 = arith.constant 0.176776692 : f32
    %54 = vector.broadcast %cst_24 : f32 to vector<8x8xf32>
    %55 = arith.mulf %53, %54 : vector<8x8xf32>
    %56 = vector.extract_strided_slice %28 {offsets = [0, 40], sizes = [8, 8], strides = [1, 1]} : vector<8x96xf32> to vector<8x8xf32>
    %57 = vector.extract_strided_slice %28 {offsets = [0, 72], sizes = [8, 8], strides = [1, 1]} : vector<8x96xf32> to vector<8x8xf32>
    %cst_25 = arith.constant dense<0.000000e+00> : vector<8x8xf32>
    %58 = tpu.matmul %55, %56, %cst_25 {dimension_numbers = #tpu.dot_dimension_numbers<[1], [1], [0], [0], [0, 0, 1, 0], [], []>} : vector<8x8xf32>, vector<8x8xf32>, vector<8x8xf32> -> vector<8x8xf32>
    %cst_26 = arith.constant dense<0xFF800000> : vector<8xf32>
    %59 = vector.multi_reduction <maximumf>, %58, %cst_26 [1] : vector<8x8xf32> to vector<8xf32>
    %60 = vector.shape_cast %59 : vector<8xf32> to vector<8x1xf32>
    %61 = vector.broadcast %60 : vector<8x1xf32> to vector<8x8xf32>
    %62 = arith.subf %58, %61 : vector<8x8xf32>
    %63 = math.exp %62 : vector<8x8xf32>
    %cst_27 = arith.constant dense<0.000000e+00> : vector<8xf32>
    %64 = vector.multi_reduction <add>, %63, %cst_27 [1] : vector<8x8xf32> to vector<8xf32>
    %65 = vector.shape_cast %64 : vector<8xf32> to vector<8x1xf32>
    %66 = tpu.reciprocal %65 {approx = true} : vector<8x1xf32> -> vector<8x1xf32>
    %67 = arith.mulf %65, %66 : vector<8x1xf32>
    %cst_28 = arith.constant 2.000000e+00 : f32
    %68 = vector.broadcast %cst_28 : f32 to vector<8x1xf32>
    %69 = arith.subf %68, %67 : vector<8x1xf32>
    %70 = arith.mulf %66, %69 : vector<8x1xf32>
    %71 = vector.broadcast %70 : vector<8x1xf32> to vector<8x8xf32>
    %72 = arith.mulf %63, %71 : vector<8x8xf32>
    %cst_29 = arith.constant dense<0.000000e+00> : vector<8x8xf32>
    %73 = tpu.matmul %72, %57, %cst_29 {dimension_numbers = #tpu.dot_dimension_numbers<[1], [0], [0], [1], [0, 0, 1, 1], [], []>} : vector<8x8xf32>, vector<8x8xf32>, vector<8x8xf32> -> vector<8x8xf32>
    %74 = vector.extract_strided_slice %29 {offsets = [8, 0], sizes = [8, 32], strides = [1, 1]} : vector<32x32xf32> to vector<8x32xf32>
    %cst_30 = arith.constant dense<0.000000e+00> : vector<8x32xf32>
    %75 = tpu.matmul %73, %74, %cst_30 {dimension_numbers = #tpu.dot_dimension_numbers<[1], [0], [0], [1], [0, 0, 1, 1], [], []>} : vector<8x8xf32>, vector<8x32xf32>, vector<8x32xf32> -> vector<8x32xf32>
    %76 = arith.addf %52, %75 : vector<8x32xf32>
    %77 = vector.extract_strided_slice %28 {offsets = [0, 16], sizes = [8, 8], strides = [1, 1]} : vector<8x96xf32> to vector<8x8xf32>
    %cst_31 = arith.constant 0.176776692 : f32
    %78 = vector.broadcast %cst_31 : f32 to vector<8x8xf32>
    %79 = arith.mulf %77, %78 : vector<8x8xf32>
    %80 = vector.extract_strided_slice %28 {offsets = [0, 48], sizes = [8, 8], strides = [1, 1]} : vector<8x96xf32> to vector<8x8xf32>
    %81 = vector.extract_strided_slice %28 {offsets = [0, 80], sizes = [8, 8], strides = [1, 1]} : vector<8x96xf32> to vector<8x8xf32>
    %cst_32 = arith.constant dense<0.000000e+00> : vector<8x8xf32>
    %82 = tpu.matmul %79, %80, %cst_32 {dimension_numbers = #tpu.dot_dimension_numbers<[1], [1], [0], [0], [0, 0, 1, 0], [], []>} : vector<8x8xf32>, vector<8x8xf32>, vector<8x8xf32> -> vector<8x8xf32>
    %cst_33 = arith.constant dense<0xFF800000> : vector<8xf32>
    %83 = vector.multi_reduction <maximumf>, %82, %cst_33 [1] : vector<8x8xf32> to vector<8xf32>
    %84 = vector.shape_cast %83 : vector<8xf32> to vector<8x1xf32>
    %85 = vector.broadcast %84 : vector<8x1xf32> to vector<8x8xf32>
    %86 = arith.subf %82, %85 : vector<8x8xf32>
    %87 = math.exp %86 : vector<8x8xf32>
    %cst_34 = arith.constant dense<0.000000e+00> : vector<8xf32>
    %88 = vector.multi_reduction <add>, %87, %cst_34 [1] : vector<8x8xf32> to vector<8xf32>
    %89 = vector.shape_cast %88 : vector<8xf32> to vector<8x1xf32>
    %90 = tpu.reciprocal %89 {approx = true} : vector<8x1xf32> -> vector<8x1xf32>
    %91 = arith.mulf %89, %90 : vector<8x1xf32>
    %cst_35 = arith.constant 2.000000e+00 : f32
    %92 = vector.broadcast %cst_35 : f32 to vector<8x1xf32>
    %93 = arith.subf %92, %91 : vector<8x1xf32>
    %94 = arith.mulf %90, %93 : vector<8x1xf32>
    %95 = vector.broadcast %94 : vector<8x1xf32> to vector<8x8xf32>
    %96 = arith.mulf %87, %95 : vector<8x8xf32>
    %cst_36 = arith.constant dense<0.000000e+00> : vector<8x8xf32>
    %97 = tpu.matmul %96, %81, %cst_36 {dimension_numbers = #tpu.dot_dimension_numbers<[1], [0], [0], [1], [0, 0, 1, 1], [], []>} : vector<8x8xf32>, vector<8x8xf32>, vector<8x8xf32> -> vector<8x8xf32>
    %98 = vector.extract_strided_slice %29 {offsets = [16, 0], sizes = [8, 32], strides = [1, 1]} : vector<32x32xf32> to vector<8x32xf32>
    %cst_37 = arith.constant dense<0.000000e+00> : vector<8x32xf32>
    %99 = tpu.matmul %97, %98, %cst_37 {dimension_numbers = #tpu.dot_dimension_numbers<[1], [0], [0], [1], [0, 0, 1, 1], [], []>} : vector<8x8xf32>, vector<8x32xf32>, vector<8x32xf32> -> vector<8x32xf32>
    %100 = arith.addf %76, %99 : vector<8x32xf32>
    %101 = vector.extract_strided_slice %28 {offsets = [0, 24], sizes = [8, 8], strides = [1, 1]} : vector<8x96xf32> to vector<8x8xf32>
    %cst_38 = arith.constant 0.176776692 : f32
    %102 = vector.broadcast %cst_38 : f32 to vector<8x8xf32>
    %103 = arith.mulf %101, %102 : vector<8x8xf32>
    %104 = vector.extract_strided_slice %28 {offsets = [0, 56], sizes = [8, 8], strides = [1, 1]} : vector<8x96xf32> to vector<8x8xf32>
    %105 = vector.extract_strided_slice %28 {offsets = [0, 88], sizes = [8, 8], strides = [1, 1]} : vector<8x96xf32> to vector<8x8xf32>
    %cst_39 = arith.constant dense<0.000000e+00> : vector<8x8xf32>
    %106 = tpu.matmul %103, %104, %cst_39 {dimension_numbers = #tpu.dot_dimension_numbers<[1], [1], [0], [0], [0, 0, 1, 0], [], []>} : vector<8x8xf32>, vector<8x8xf32>, vector<8x8xf32> -> vector<8x8xf32>
    %cst_40 = arith.constant dense<0xFF800000> : vector<8xf32>
    %107 = vector.multi_reduction <maximumf>, %106, %cst_40 [1] : vector<8x8xf32> to vector<8xf32>
    %108 = vector.shape_cast %107 : vector<8xf32> to vector<8x1xf32>
    %109 = vector.broadcast %108 : vector<8x1xf32> to vector<8x8xf32>
    %110 = arith.subf %106, %109 : vector<8x8xf32>
    %111 = math.exp %110 : vector<8x8xf32>
    %cst_41 = arith.constant dense<0.000000e+00> : vector<8xf32>
    %112 = vector.multi_reduction <add>, %111, %cst_41 [1] : vector<8x8xf32> to vector<8xf32>
    %113 = vector.shape_cast %112 : vector<8xf32> to vector<8x1xf32>
    %114 = tpu.reciprocal %113 {approx = true} : vector<8x1xf32> -> vector<8x1xf32>
    %115 = arith.mulf %113, %114 : vector<8x1xf32>
    %cst_42 = arith.constant 2.000000e+00 : f32
    %116 = vector.broadcast %cst_42 : f32 to vector<8x1xf32>
    %117 = arith.subf %116, %115 : vector<8x1xf32>
    %118 = arith.mulf %114, %117 : vector<8x1xf32>
    %119 = vector.broadcast %118 : vector<8x1xf32> to vector<8x8xf32>
    %120 = arith.mulf %111, %119 : vector<8x8xf32>
    %cst_43 = arith.constant dense<0.000000e+00> : vector<8x8xf32>
    %121 = tpu.matmul %120, %105, %cst_43 {dimension_numbers = #tpu.dot_dimension_numbers<[1], [0], [0], [1], [0, 0, 1, 1], [], []>} : vector<8x8xf32>, vector<8x8xf32>, vector<8x8xf32> -> vector<8x8xf32>
    %122 = vector.extract_strided_slice %29 {offsets = [24, 0], sizes = [8, 32], strides = [1, 1]} : vector<32x32xf32> to vector<8x32xf32>
    %cst_44 = arith.constant dense<0.000000e+00> : vector<8x32xf32>
    %123 = tpu.matmul %121, %122, %cst_44 {dimension_numbers = #tpu.dot_dimension_numbers<[1], [0], [0], [1], [0, 0, 1, 1], [], []>} : vector<8x8xf32>, vector<8x32xf32>, vector<8x32xf32> -> vector<8x32xf32>
    %124 = arith.addf %100, %123 : vector<8x32xf32>
    %c0_45 = arith.constant 0 : index
    %c0_46 = arith.constant 0 : index
    %125 = vector.load %arg7[%c0_45, %c0_46] : memref<1x32xf32, #tpu.memory_space<vmem>>, vector<1x32xf32>
    %126 = vector.broadcast %125 : vector<1x32xf32> to vector<8x32xf32>
    %127 = arith.addf %124, %126 : vector<8x32xf32>
    %128 = arith.addf %127, %1 : vector<8x32xf32>
    %c0_47 = arith.constant 0 : index
    %c0_48 = arith.constant 0 : index
    %129 = vector.load %arg8[%c0_47, %c0_48] : memref<1x32xf32, #tpu.memory_space<vmem>>, vector<1x32xf32>
    %c0_49 = arith.constant 0 : index
    %c0_50 = arith.constant 0 : index
    %130 = vector.load %arg9[%c0_49, %c0_50] : memref<1x32xf32, #tpu.memory_space<vmem>>, vector<1x32xf32>
    %cst_51 = arith.constant dense<0.000000e+00> : vector<8xf32>
    %131 = vector.multi_reduction <add>, %128, %cst_51 [1] : vector<8x32xf32> to vector<8xf32>
    %132 = vector.shape_cast %131 : vector<8xf32> to vector<8x1xf32>
    %cst_52 = arith.constant 3.200000e+01 : f32
    %133 = vector.broadcast %cst_52 : f32 to vector<8x1xf32>
    %134 = arith.divf %132, %133 : vector<8x1xf32>
    %135 = vector.broadcast %134 : vector<8x1xf32> to vector<8x32xf32>
    %136 = arith.subf %128, %135 : vector<8x32xf32>
    %137 = arith.mulf %136, %136 : vector<8x32xf32>
    %cst_53 = arith.constant dense<0.000000e+00> : vector<8xf32>
    %138 = vector.multi_reduction <add>, %137, %cst_53 [1] : vector<8x32xf32> to vector<8xf32>
    %139 = vector.shape_cast %138 : vector<8xf32> to vector<8x1xf32>
    %cst_54 = arith.constant 3.200000e+01 : f32
    %140 = vector.broadcast %cst_54 : f32 to vector<8x1xf32>
    %141 = arith.divf %139, %140 : vector<8x1xf32>
    %cst_55 = arith.constant 9.99999974E-6 : f32
    %142 = vector.broadcast %cst_55 : f32 to vector<8x1xf32>
    %143 = arith.addf %141, %142 : vector<8x1xf32>
    %144 = math.rsqrt %143 : vector<8x1xf32>
    %145 = vector.broadcast %144 : vector<8x1xf32> to vector<8x32xf32>
    %146 = arith.mulf %136, %145 : vector<8x32xf32>
    %147 = vector.broadcast %129 : vector<1x32xf32> to vector<8x32xf32>
    %148 = arith.mulf %146, %147 : vector<8x32xf32>
    %149 = vector.broadcast %130 : vector<1x32xf32> to vector<8x32xf32>
    %150 = arith.addf %148, %149 : vector<8x32xf32>
    %c0_56 = arith.constant 0 : index
    %c0_57 = arith.constant 0 : index
    %151 = vector.load %arg10[%c0_56, %c0_57] : memref<32x64xf32, #tpu.memory_space<vmem>>, vector<32x64xf32>
    %cst_58 = arith.constant dense<0.000000e+00> : vector<8x64xf32>
    %152 = tpu.matmul %150, %151, %cst_58 {dimension_numbers = #tpu.dot_dimension_numbers<[1], [0], [0], [1], [0, 0, 1, 1], [], []>} : vector<8x32xf32>, vector<32x64xf32>, vector<8x64xf32> -> vector<8x64xf32>
    %c0_59 = arith.constant 0 : index
    %c0_60 = arith.constant 0 : index
    %153 = vector.load %arg11[%c0_59, %c0_60] : memref<1x64xf32, #tpu.memory_space<vmem>>, vector<1x64xf32>
    %154 = vector.broadcast %153 : vector<1x64xf32> to vector<8x64xf32>
    %155 = arith.addf %152, %154 : vector<8x64xf32>
    %cst_61 = arith.constant 5.000000e-01 : f32
    %156 = vector.broadcast %cst_61 : f32 to vector<8x64xf32>
    %157 = arith.mulf %156, %155 : vector<8x64xf32>
    %cst_62 = arith.constant 4.471500e-02 : f32
    %158 = vector.broadcast %cst_62 : f32 to vector<8x64xf32>
    %159 = arith.mulf %158, %155 : vector<8x64xf32>
    %160 = arith.mulf %159, %155 : vector<8x64xf32>
    %161 = arith.mulf %160, %155 : vector<8x64xf32>
    %162 = arith.addf %155, %161 : vector<8x64xf32>
    %cst_63 = arith.constant 0.797884583 : f32
    %163 = vector.broadcast %cst_63 : f32 to vector<8x64xf32>
    %164 = arith.mulf %163, %162 : vector<8x64xf32>
    %165 = math.tanh %164 : vector<8x64xf32>
    %cst_64 = arith.constant 1.000000e+00 : f32
    %166 = vector.broadcast %cst_64 : f32 to vector<8x64xf32>
    %167 = arith.addf %166, %165 : vector<8x64xf32>
    %168 = arith.mulf %157, %167 : vector<8x64xf32>
    %c0_65 = arith.constant 0 : index
    %c0_66 = arith.constant 0 : index
    %169 = vector.load %arg12[%c0_65, %c0_66] : memref<64x32xf32, #tpu.memory_space<vmem>>, vector<64x32xf32>
    %cst_67 = arith.constant dense<0.000000e+00> : vector<8x32xf32>
    %170 = tpu.matmul %168, %169, %cst_67 {dimension_numbers = #tpu.dot_dimension_numbers<[1], [0], [0], [1], [0, 0, 1, 1], [], []>} : vector<8x64xf32>, vector<64x32xf32>, vector<8x32xf32> -> vector<8x32xf32>
    %c0_68 = arith.constant 0 : index
    %c0_69 = arith.constant 0 : index
    %171 = vector.load %arg13[%c0_68, %c0_69] : memref<1x32xf32, #tpu.memory_space<vmem>>, vector<1x32xf32>
    %172 = vector.broadcast %171 : vector<1x32xf32> to vector<8x32xf32>
    %173 = arith.addf %170, %172 : vector<8x32xf32>
    %174 = arith.addf %173, %128 : vector<8x32xf32>
    %c0_70 = arith.constant 0 : index
    %c0_71 = arith.constant 0 : index
    %c0_72 = arith.constant 0 : index
    %175 = vector.load %arg14[%c0_70, %c0_71, %c0_72] : memref<1x8x32xf32, #tpu.memory_space<vmem>>, vector<1x8x32xf32>
    %176 = vector.shape_cast %175 : vector<1x8x32xf32> to vector<8x32xf32>
    %177 = vector.shape_cast %174 : vector<8x32xf32> to vector<1x8x32xf32>
    tpu.vector_store %arg14[%c0_70, %c0_71, %c0_72], %177 {strides = array<i32>} : memref<1x8x32xf32, #tpu.memory_space<vmem>>, vector<1x8x32xf32>,
    return
  }
  func.func @transform_0(%arg0: i32) -> (i32, i32, i32) {
    %c0_i32 = arith.constant 0 : i32
    %c0_i32_0 = arith.constant 0 : i32
    %c0_i32_1 = arith.constant 0 : i32
    return %arg0, %c0_i32, %c0_i32_0 : i32, i32, i32
  }
  func.func @transform_1(%arg0: i32) -> (i32, i32) {
    %c0_i32 = arith.constant 0 : i32
    %c0_i32_0 = arith.constant 0 : i32
    %c0_i32_1 = arith.constant 0 : i32
    return %c0_i32, %c0_i32_0 : i32, i32
  }
  func.func @transform_2(%arg0: i32) -> (i32, i32) {
    %c0_i32 = arith.constant 0 : i32
    %c0_i32_0 = arith.constant 0 : i32
    %c0_i32_1 = arith.constant 0 : i32
    return %c0_i32, %c0_i32_0 : i32, i32
  }
  func.func @transform_3(%arg0: i32) -> (i32, i32) {
    %c0_i32 = arith.constant 0 : i32
    %c0_i32_0 = arith.constant 0 : i32
    %c0_i32_1 = arith.constant 0 : i32
    return %c0_i32, %c0_i32_0 : i32, i32
  }
  func.func @transform_4(%arg0: i32) -> (i32, i32) {
    %c0_i32 = arith.constant 0 : i32
    %c0_i32_0 = arith.constant 0 : i32
    %c0_i32_1 = arith.constant 0 : i32
    return %c0_i32, %c0_i32_0 : i32, i32
  }
  func.func @transform_5(%arg0: i32) -> (i32, i32) {
    %c0_i32 = arith.constant 0 : i32
    %c0_i32_0 = arith.constant 0 : i32
    %c0_i32_1 = arith.constant 0 : i32
    return %c0_i32, %c0_i32_0 : i32, i32
  }
  func.func @transform_6(%arg0: i32) -> (i32, i32) {
    %c0_i32 = arith.constant 0 : i32
    %c0_i32_0 = arith.constant 0 : i32
    %c0_i32_1 = arith.constant 0 : i32
    return %c0_i32, %c0_i32_0 : i32, i32
  }
  func.func @transform_7(%arg0: i32) -> (i32, i32) {
    %c0_i32 = arith.constant 0 : i32
    %c0_i32_0 = arith.constant 0 : i32
    %c0_i32_1 = arith.constant 0 : i32
    return %c0_i32, %c0_i32_0 : i32, i32
  }
  func.func @transform_8(%arg0: i32) -> (i32, i32) {
    %c0_i32 = arith.constant 0 : i32
    %c0_i32_0 = arith.constant 0 : i32
    %c0_i32_1 = arith.constant 0 : i32
    return %c0_i32, %c0_i32_0 : i32, i32
  }
  func.func @transform_9(%arg0: i32) -> (i32, i32) {
    %c0_i32 = arith.constant 0 : i32
    %c0_i32_0 = arith.constant 0 : i32
    %c0_i32_1 = arith.constant 0 : i32
    return %c0_i32, %c0_i32_0 : i32, i32
  }
  func.func @transform_10(%arg0: i32) -> (i32, i32) {
    %c0_i32 = arith.constant 0 : i32
    %c0_i32_0 = arith.constant 0 : i32
    %c0_i32_1 = arith.constant 0 : i32
    return %c0_i32, %c0_i32_0 : i32, i32
  }
  func.func @transform_11(%arg0: i32) -> (i32, i32) {
    %c0_i32 = arith.constant 0 : i32
    %c0_i32_0 = arith.constant 0 : i32
    %c0_i32_1 = arith.constant 0 : i32
    return %c0_i32, %c0_i32_0 : i32, i32
  }
  func.func @transform_12(%arg0: i32) -> (i32, i32) {
    %c0_i32 = arith.constant 0 : i32
    %c0_i32_0 = arith.constant 0 : i32
    %c0_i32_1 = arith.constant 0 : i32
    return %c0_i32, %c0_i32_0 : i32, i32
  }
  func.func @transform_13(%arg0: i32) -> (i32, i32, i32) {
    %c0_i32 = arith.constant 0 : i32
    %c0_i32_0 = arith.constant 0 : i32
    %c0_i32_1 = arith.constant 0 : i32
    return %arg0, %c0_i32, %c0_i32_0 : i32, i32, i32
  }
}

</mosaic_0001>

<llo_original>
// kernel: tpu_custom_call.1
$region0: #{tpu_custom_call.1}
  #allocation0 [shape = 'u32[]', space=smem, size = 0x4, offset = 0x4, fixed_abs, tag = 'smem constant byte address 0x4 - core index']
  #allocation1 [shape = 'u32[72,128]{1,0:T(1,128)}', space=vmem, size = 0x9000, scoped, tag = 'internal scratch']
  %s0 = inlined_call_operand.hbm [shape: f32[2,8,32], index: 0, kind: input, shape index: {}]
  %s1 = inlined_call_operand.hbm [shape: f32[1,32], index: 1, kind: input, shape index: {}]
  %s2 = inlined_call_operand.vmem [shape: f32[1,32], index: 2, kind: input, shape index: {}]
  %s3 = inlined_call_operand.vmem [shape: f32[32,96], index: 3, kind: input, shape index: {}]
  %s4 = inlined_call_operand.vmem [shape: f32[1,96], index: 4, kind: input, shape index: {}]
  %s5 = inlined_call_operand.vmem [shape: f32[32,32], index: 5, kind: input, shape index: {}]
  %s6 = inlined_call_operand.vmem [shape: f32[1,32], index: 6, kind: input, shape index: {}]
  %s7 = inlined_call_operand.vmem [shape: f32[1,32], index: 7, kind: input, shape index: {}]
  %s8 = inlined_call_operand.vmem [shape: f32[1,32], index: 8, kind: input, shape index: {}]
  %s9 = inlined_call_operand.vmem [shape: f32[32,64], index: 9, kind: input, shape index: {}]
  %s10 = inlined_call_operand.vmem [shape: f32[1,64], index: 10, kind: input, shape index: {}]
  %s11 = inlined_call_operand.vmem [shape: f32[64,32], index: 11, kind: input, shape index: {}]
  %s12 = inlined_call_operand.vmem [shape: f32[1,32], index: 12, kind: input, shape index: {}]
  %s13 = inlined_call_operand.hbm [shape: f32[2,8,32], index: 13, kind: output, shape index: {}]
  %s14 = sld [smem:[#allocation0]]
  $region93: #{tpu_custom_call.1} parent=0
    _
  %s16 = ssub.s32 1, %s14
  %s17 = scalar_select 0, %s16, %s14
  $region1: #{tpu_custom_call.1} parent=0
    #allocation2 [shape = 'u8[8192]{0}', space=vmem, size = 0x2000, scoped, tag = 'input window, operand 0']
    #allocation3 [shape = 's32[2]{0}', space=sflag, size = 0x8, scoped, tag = 'scoped memory for tpu_custom_call.1']
    #allocation4 [shape = 's32[2]{0}', space=sflag, size = 0x8, scoped, tag = 'scoped memory for tpu_custom_call.1']
    #allocation5 [shape = 'u8[512]{0}', space=vmem, size = 0x400, scoped, tag = 'input window, operand 1, single buffered']
    #allocation6 [shape = 's32[1]{0}', space=sflag, size = 0x4, scoped, tag = 'scoped memory for tpu_custom_call.1']
    #allocation7 [shape = 'u8[8192]{0}', space=vmem, size = 0x2000, scoped, tag = 'output window, operand 0']
    %18 = vsyncpa [#allocation3], 0
    %s19 = scalar_lea.sflag [#allocation3], 1
    %20 = vsyncpa %s19, 0
    %21 = vsyncpa [#allocation6], 0
    %22 = vsyncpa [#allocation4], 0
    %s23 = scalar_lea.sflag [#allocation4], 1
    %24 = vsyncpa %s23, 0
    loop: start=0, step=1, limit=4
    $region2: #{tpu_custom_call.1} parent=1 // loop_pre_header
      _
    $region3: #{tpu_custom_call.1} parent=1 // loop_header
      %s26 = sphi 0, %s30
      %p27 = scmp.ge.s32.totalorder %s26, 4
      %s36 = sphi 0, %s38
      %s39 = sphi 0, %s36
      %s40 = sphi 0, %s39
      %s56 = sphi 0, %s40
      %s60 = sphi 0, %s60
      %s62 = sphi 0, %s60
      %s63 = sphi 0, %s62
      %s77 = sphi 0, %s63
      %s81 = sphi 0, %s81
      %s83 = sphi 0, %s81
      %s84 = sphi 0, %s83
      %s98 = sphi 0, %s84
      %s102 = sphi 0, %s102
      %s104 = sphi 0, %s102
      %s105 = sphi 0, %s104
      %s119 = sphi 0, %s105
      %s123 = sphi 0, %s123
      %s125 = sphi 0, %s123
      %s126 = sphi 0, %s125
      %s140 = sphi 0, %s126
      %s144 = sphi 0, %s144
      %s146 = sphi 0, %s144
      %s147 = sphi 0, %s146
      %s161 = sphi 0, %s147
      %s165 = sphi 0, %s165
      %s167 = sphi 0, %s165
      %s168 = sphi 0, %s167
      %s182 = sphi 0, %s168
      %s186 = sphi 0, %s186
      %s188 = sphi 0, %s186
      %s189 = sphi 0, %s188
      %s203 = sphi 0, %s189
      %s207 = sphi 0, %s207
      %s209 = sphi 0, %s207
      %s210 = sphi 0, %s209
      %s224 = sphi 0, %s210
      %s228 = sphi 0, %s228
      %s230 = sphi 0, %s228
      %s231 = sphi 0, %s230
      %s245 = sphi 0, %s231
      %s249 = sphi 0, %s249
      %s251 = sphi 0, %s249
      %s252 = sphi 0, %s251
      %s266 = sphi 0, %s252
      %s270 = sphi 0, %s270
      %s272 = sphi 0, %s270
      %s273 = sphi 0, %s272
      %s287 = sphi 0, %s273
      %s291 = sphi 0, %s291
      %s293 = sphi 0, %s291
      %s294 = sphi 0, %s293
      %s308 = sphi 0, %s294
      %s314 = sphi 0, %s316
      %s317 = sphi 0, %s314
      %s318 = sphi 0, %s317
      %s334 = sphi 0, %s318
    $region4: #{tpu_custom_call.1} parent=1 // loop_header_branch
      %29 = sbr.rel (%p27) target = $region8
    $region5: #{tpu_custom_call.1} parent=1 // loop_body
      %s31 = ssub.s32 %s26, 1
      %s32 = ssub.s32 %s26, 2
      %s33 = sadd.s32 %s26, 1
      %s34 = ssub.s32 %s26, %s33
      %p35 = scmp.eq.s32.totalorder %s34, 0
      %s37 = sadd.s32 %s36, 1
      %s38 = scalar_select %p35, %s36, %s37
      %p41 = pneg %p35
      %p42 = scmp.eq.s32.totalorder %s26, 1
      %p43 = por %p41, %p42
      %p44 = scmp.ne.s32.totalorder %s36, %s39
      %p45 = scmp.eq.s32.totalorder %s26, 0
      %p46 = por %p44, %p45
      %p47 = scmp.ne.s32.totalorder %s36, %s39
      %p48 = scmp.eq.s32.totalorder %s31, 1
      %p49 = por %p47, %p48
      %p50 = scmp.ne.s32.totalorder %s39, %s40
      %p51 = scmp.eq.s32.totalorder %s31, 0
      %p52 = por %p50, %p51
      %p53 = scmp.ne.s32.totalorder %s39, %s40
      %p54 = scmp.eq.s32.totalorder %s32, 1
      %p55 = por %p53, %p54
      %p57 = scmp.ne.s32.totalorder %s40, %s56
      %p58 = scmp.eq.s32.totalorder %s32, 0
      %p59 = por %p57, %p58
      %s61 = sadd.s32 %s60, 1
      %p64 = scmp.eq.s32.totalorder %s26, 1
      %p65 = scmp.ne.s32.totalorder %s60, %s62
      %p66 = scmp.eq.s32.totalorder %s26, 0
      %p67 = por %p65, %p66
      %p68 = scmp.ne.s32.totalorder %s60, %s62
      %p69 = scmp.eq.s32.totalorder %s31, 1
      %p70 = por %p68, %p69
      %p71 = scmp.ne.s32.totalorder %s62, %s63
      %p72 = scmp.eq.s32.totalorder %s31, 0
      %p73 = por %p71, %p72
      %p74 = scmp.ne.s32.totalorder %s62, %s63
      %p75 = scmp.eq.s32.totalorder %s32, 1
      %p76 = por %p74, %p75
      %p78 = scmp.ne.s32.totalorder %s63, %s77
      %p79 = scmp.eq.s32.totalorder %s32, 0
      %p80 = por %p78, %p79
      %s82 = sadd.s32 %s81, 1
      %p85 = scmp.eq.s32.totalorder %s26, 1
      %p86 = scmp.ne.s32.totalorder %s81, %s83
      %p87 = scmp.eq.s32.totalorder %s26, 0
      %p88 = por %p86, %p87
      %p89 = scmp.ne.s32.totalorder %s81, %s83
      %p90 = scmp.eq.s32.totalorder %s31, 1
      %p91 = por %p89, %p90
      %p92 = scmp.ne.s32.totalorder %s83, %s84
      %p93 = scmp.eq.s32.totalorder %s31, 0
      %p94 = por %p92, %p93
      %p95 = scmp.ne.s32.totalorder %s83, %s84
      %p96 = scmp.eq.s32.totalorder %s32, 1
      %p97 = por %p95, %p96
      %p99 = scmp.ne.s32.totalorder %s84, %s98
      %p100 = scmp.eq.s32.totalorder %s32, 0
      %p101 = por %p99, %p100
      %s103 = sadd.s32 %s102, 1
      %p106 = scmp.eq.s32.totalorder %s26, 1
      %p107 = scmp.ne.s32.totalorder %s102, %s104
      %p108 = scmp.eq.s32.totalorder %s26, 0
      %p109 = por %p107, %p108
      %p110 = scmp.ne.s32.totalorder %s102, %s104
      %p111 = scmp.eq.s32.totalorder %s31, 1
      %p112 = por %p110, %p111
      %p113 = scmp.ne.s32.totalorder %s104, %s105
      %p114 = scmp.eq.s32.totalorder %s31, 0
      %p115 = por %p113, %p114
      %p116 = scmp.ne.s32.totalorder %s104, %s105
      %p117 = scmp.eq.s32.totalorder %s32, 1
      %p118 = por %p116, %p117
      %p120 = scmp.ne.s32.totalorder %s105, %s119
      %p121 = scmp.eq.s32.totalorder %s32, 0
      %p122 = por %p120, %p121
      %s124 = sadd.s32 %s123, 1
      %p127 = scmp.eq.s32.totalorder %s26, 1
      %p128 = scmp.ne.s32.totalorder %s123, %s125
      %p129 = scmp.eq.s32.totalorder %s26, 0
      %p130 = por %p128, %p129
      %p131 = scmp.ne.s32.totalorder %s123, %s125
      %p132 = scmp.eq.s32.totalorder %s31, 1
      %p133 = por %p131, %p132
      %p134 = scmp.ne.s32.totalorder %s125, %s126
      %p135 = scmp.eq.s32.totalorder %s31, 0
      %p136 = por %p134, %p135
      %p137 = scmp.ne.s32.totalorder %s125, %s126
      %p138 = scmp.eq.s32.totalorder %s32, 1
      %p139 = por %p137, %p138
      %p141 = scmp.ne.s32.totalorder %s126, %s140
      %p142 = scmp.eq.s32.totalorder %s32, 0
      %p143 = por %p141, %p142
      %s145 = sadd.s32 %s144, 1
      %p148 = scmp.eq.s32.totalorder %s26, 1
      %p149 = scmp.ne.s32.totalorder %s144, %s146
      %p150 = scmp.eq.s32.totalorder %s26, 0
      %p151 = por %p149, %p150
      %p152 = scmp.ne.s32.totalorder %s144, %s146
      %p153 = scmp.eq.s32.totalorder %s31, 1
      %p154 = por %p152, %p153
      %p155 = scmp.ne.s32.totalorder %s146, %s147
      %p156 = scmp.eq.s32.totalorder %s31, 0
      %p157 = por %p155, %p156
      %p158 = scmp.ne.s32.totalorder %s146, %s147
      %p159 = scmp.eq.s32.totalorder %s32, 1
      %p160 = por %p158, %p159
      %p162 = scmp.ne.s32.totalorder %s147, %s161
      %p163 = scmp.eq.s32.totalorder %s32, 0
      %p164 = por %p162, %p163
      %s166 = sadd.s32 %s165, 1
      %p169 = scmp.eq.s32.totalorder %s26, 1
      %p170 = scmp.ne.s32.totalorder %s165, %s167
      %p171 = scmp.eq.s32.totalorder %s26, 0
      %p172 = por %p170, %p171
      %p173 = scmp.ne.s32.totalorder %s165, %s167
      %p174 = scmp.eq.s32.totalorder %s31, 1
      %p175 = por %p173, %p174
      %p176 = scmp.ne.s32.totalorder %s167, %s168
      %p177 = scmp.eq.s32.totalorder %s31, 0
      %p178 = por %p176, %p177
      %p179 = scmp.ne.s32.totalorder %s167, %s168
      %p180 = scmp.eq.s32.totalorder %s32, 1
      %p181 = por %p179, %p180
      %p183 = scmp.ne.s32.totalorder %s168, %s182
      %p184 = scmp.eq.s32.totalorder %s32, 0
      %p185 = por %p183, %p184
      %s187 = sadd.s32 %s186, 1
      %p190 = scmp.eq.s32.totalorder %s26, 1
      %p191 = scmp.ne.s32.totalorder %s186, %s188
      %p192 = scmp.eq.s32.totalorder %s26, 0
      %p193 = por %p191, %p192
      %p194 = scmp.ne.s32.totalorder %s186, %s188
      %p195 = scmp.eq.s32.totalorder %s31, 1
      %p196 = por %p194, %p195
      %p197 = scmp.ne.s32.totalorder %s188, %s189
      %p198 = scmp.eq.s32.totalorder %s31, 0
      %p199 = por %p197, %p198
      %p200 = scmp.ne.s32.totalorder %s188, %s189
      %p201 = scmp.eq.s32.totalorder %s32, 1
      %p202 = por %p200, %p201
      %p204 = scmp.ne.s32.totalorder %s189, %s203
      %p205 = scmp.eq.s32.totalorder %s32, 0
      %p206 = por %p204, %p205
      %s208 = sadd.s32 %s207, 1
      %p211 = scmp.eq.s32.totalorder %s26, 1
      %p212 = scmp.ne.s32.totalorder %s207, %s209
      %p213 = scmp.eq.s32.totalorder %s26, 0
      %p214 = por %p212, %p213
      %p215 = scmp.ne.s32.totalorder %s207, %s209
      %p216 = scmp.eq.s32.totalorder %s31, 1
      %p217 = por %p215, %p216
      %p218 = scmp.ne.s32.totalorder %s209, %s210
      %p219 = scmp.eq.s32.totalorder %s31, 0
      %p220 = por %p218, %p219
      %p221 = scmp.ne.s32.totalorder %s209, %s210
      %p222 = scmp.eq.s32.totalorder %s32, 1
      %p223 = por %p221, %p222
      %p225 = scmp.ne.s32.totalorder %s210, %s224
      %p226 = scmp.eq.s32.totalorder %s32, 0
      %p227 = por %p225, %p226
      %s229 = sadd.s32 %s228, 1
      %p232 = scmp.eq.s32.totalorder %s26, 1
      %p233 = scmp.ne.s32.totalorder %s228, %s230
      %p234 = scmp.eq.s32.totalorder %s26, 0
      %p235 = por %p233, %p234
      %p236 = scmp.ne.s32.totalorder %s228, %s230
      %p237 = scmp.eq.s32.totalorder %s31, 1
      %p238 = por %p236, %p237
      %p239 = scmp.ne.s32.totalorder %s230, %s231
      %p240 = scmp.eq.s32.totalorder %s31, 0
      %p241 = por %p239, %p240
      %p242 = scmp.ne.s32.totalorder %s230, %s231
      %p243 = scmp.eq.s32.totalorder %s32, 1
      %p244 = por %p242, %p243
      %p246 = scmp.ne.s32.totalorder %s231, %s245
      %p247 = scmp.eq.s32.totalorder %s32, 0
      %p248 = por %p246, %p247
      %s250 = sadd.s32 %s249, 1
      %p253 = scmp.eq.s32.totalorder %s26, 1
      %p254 = scmp.ne.s32.totalorder %s249, %s251
      %p255 = scmp.eq.s32.totalorder %s26, 0
      %p256 = por %p254, %p255
      %p257 = scmp.ne.s32.totalorder %s249, %s251
      %p258 = scmp.eq.s32.totalorder %s31, 1
      %p259 = por %p257, %p258
      %p260 = scmp.ne.s32.totalorder %s251, %s252
      %p261 = scmp.eq.s32.totalorder %s31, 0
      %p262 = por %p260, %p261
      %p263 = scmp.ne.s32.totalorder %s251, %s252
      %p264 = scmp.eq.s32.totalorder %s32, 1
      %p265 = por %p263, %p264
      %p267 = scmp.ne.s32.totalorder %s252, %s266
      %p268 = scmp.eq.s32.totalorder %s32, 0
      %p269 = por %p267, %p268
      %s271 = sadd.s32 %s270, 1
      %p274 = scmp.eq.s32.totalorder %s26, 1
      %p275 = scmp.ne.s32.totalorder %s270, %s272
      %p276 = scmp.eq.s32.totalorder %s26, 0
      %p277 = por %p275, %p276
      %p278 = scmp.ne.s32.totalorder %s270, %s272
      %p279 = scmp.eq.s32.totalorder %s31, 1
      %p280 = por %p278, %p279
      %p281 = scmp.ne.s32.totalorder %s272, %s273
      %p282 = scmp.eq.s32.totalorder %s31, 0
      %p283 = por %p281, %p282
      %p284 = scmp.ne.s32.totalorder %s272, %s273
      %p285 = scmp.eq.s32.totalorder %s32, 1
      %p286 = por %p284, %p285
      %p288 = scmp.ne.s32.totalorder %s273, %s287
      %p289 = scmp.eq.s32.totalorder %s32, 0
      %p290 = por %p288, %p289
      %s292 = sadd.s32 %s291, 1
      %p295 = scmp.eq.s32.totalorder %s26, 1
      %p296 = scmp.ne.s32.totalorder %s291, %s293
      %p297 = scmp.eq.s32.totalorder %s26, 0
      %p298 = por %p296, %p297
      %p299 = scmp.ne.s32.totalorder %s291, %s293
      %p300 = scmp.eq.s32.totalorder %s31, 1
      %p301 = por %p299, %p300
      %p302 = scmp.ne.s32.totalorder %s293, %s294
      %p303 = scmp.eq.s32.totalorder %s31, 0
      %p304 = por %p302, %p303
      %p305 = scmp.ne.s32.totalorder %s293, %s294
      %p306 = scmp.eq.s32.totalorder %s32, 1
      %p307 = por %p305, %p306
      %p309 = scmp.ne.s32.totalorder %s294, %s308
      %p310 = scmp.eq.s32.totalorder %s32, 0
      %p311 = por %p309, %p310
      %s312 = ssub.s32 %s26, %s33
      %p313 = scmp.eq.s32.totalorder %s312, 0
      %s315 = sadd.s32 %s314, 1
      %s316 = scalar_select %p313, %s314, %s315
      %p319 = pneg %p313
      %p320 = scmp.eq.s32.totalorder %s26, 1
      %p321 = por %p319, %p320
      %p322 = scmp.ne.s32.totalorder %s314, %s317
      %p323 = scmp.eq.s32.totalorder %s26, 0
      %p324 = por %p322, %p323
      %p325 = scmp.ne.s32.totalorder %s314, %s317
      %p326 = scmp.eq.s32.totalorder %s31, 1
      %p327 = por %p325, %p326
      %p328 = scmp.ne.s32.totalorder %s317, %s318
      %p329 = scmp.eq.s32.totalorder %s31, 0
      %p330 = por %p328, %p329
      %p331 = scmp.ne.s32.totalorder %s317, %s318
      %p332 = scmp.eq.s32.totalorder %s32, 1
      %p333 = por %p331, %p332
      %p335 = scmp.ne.s32.totalorder %s318, %s334
      %p336 = scmp.eq.s32.totalorder %s32, 0
      %p337 = por %p335, %p336
      %p338 = scmp.le.s32.totalorder 1, %s26
      %p339 = scmp.lt.s32.totalorder %s26, 3
      %p340 = pnand %p338, %p339
      %p341 = pneg %p340
      // Predicated region
      $region9: #{tpu_custom_call.1} parent=5 // pred_check
        _
      $region10: #{tpu_custom_call.1} parent=5 // pred_check_branch
        %343 = sbr.rel (%p340) target = $region12
      $region11: #{tpu_custom_call.1} parent=5 // pred_region
        %s344 = ssub.s32 %s26, 1
        // Predicated region
        $region13: #{tpu_custom_call.1} parent=11 // pred_check
          %p345 = pneg %p73
        $region14: #{tpu_custom_call.1} parent=11 // pred_check_branch
          %347 = sbr.rel (%p345) target = $region16
        $region15: #{tpu_custom_call.1} parent=11 // pred_region
          %349 = vsyncadd [#allocation6], 0
          %s351 = sshll.u32 %s1, 4
          %s352 = int_to_ptr.hbm [resolvable:$true] %s351
          %s353 = sshll.u32 [#allocation5], 4
          %s354 = int_to_ptr.vmem [resolvable:$true] %s353
          %356 = dma.hbm_to_vmem [thread:$0]  %s352, 16, %s354, [#allocation6]
        $region16: #{tpu_custom_call.1} parent=11 // pred_fallthru
          _
        // Predicated region
        $region17: #{tpu_custom_call.1} parent=11 // pred_check
          %p357 = pneg %p94
        $region18: #{tpu_custom_call.1} parent=11 // pred_check_branch
          %359 = sbr.rel (%p357) target = $region20
        $region19: #{tpu_custom_call.1} parent=11 // pred_region
          _
        $region20: #{tpu_custom_call.1} parent=11 // pred_fallthru
          _
        // Predicated region
        $region21: #{tpu_custom_call.1} parent=11 // pred_check
          %p360 = pneg %p115
        $region22: #{tpu_custom_call.1} parent=11 // pred_check_branch
          %362 = sbr.rel (%p360) target = $region24
        $region23: #{tpu_custom_call.1} parent=11 // pred_region
          _
        $region24: #{tpu_custom_call.1} parent=11 // pred_fallthru
          _
        // Predicated region
        $region25: #{tpu_custom_call.1} parent=11 // pred_check
          %p363 = pneg %p136
        $region26: #{tpu_custom_call.1} parent=11 // pred_check_branch
          %365 = sbr.rel (%p363) target = $region28
        $region27: #{tpu_custom_call.1} parent=11 // pred_region
          _
        $region28: #{tpu_custom_call.1} parent=11 // pred_fallthru
          _
        // Predicated region
        $region29: #{tpu_custom_call.1} parent=11 // pred_check
          %p366 = pneg %p157
        $region30: #{tpu_custom_call.1} parent=11 // pred_check_branch
          %368 = sbr.rel (%p366) target = $region32
        $region31: #{tpu_custom_call.1} parent=11 // pred_region
          _
        $region32: #{tpu_custom_call.1} parent=11 // pred_fallthru
          _
        // Predicated region
        $region33: #{tpu_custom_call.1} parent=11 // pred_check
          %p369 = pneg %p178
        $region34: #{tpu_custom_call.1} parent=11 // pred_check_branch
          %371 = sbr.rel (%p369) target = $region36
        $region35: #{tpu_custom_call.1} parent=11 // pred_region
          _
        $region36: #{tpu_custom_call.1} parent=11 // pred_fallthru
          _
        // Predicated region
        $region37: #{tpu_custom_call.1} parent=11 // pred_check
          %p372 = pneg %p199
        $region38: #{tpu_custom_call.1} parent=11 // pred_check_branch
          %374 = sbr.rel (%p372) target = $region40
        $region39: #{tpu_custom_call.1} parent=11 // pred_region
          _
        $region40: #{tpu_custom_call.1} parent=11 // pred_fallthru
          _
        // Predicated region
        $region41: #{tpu_custom_call.1} parent=11 // pred_check
          %p375 = pneg %p220
        $region42: #{tpu_custom_call.1} parent=11 // pred_check_branch
          %377 = sbr.rel (%p375) target = $region44
        $region43: #{tpu_custom_call.1} parent=11 // pred_region
          _
        $region44: #{tpu_custom_call.1} parent=11 // pred_fallthru
          _
        // Predicated region
        $region45: #{tpu_custom_call.1} parent=11 // pred_check
          %p378 = pneg %p241
        $region46: #{tpu_custom_call.1} parent=11 // pred_check_branch
          %380 = sbr.rel (%p378) target = $region48
        $region47: #{tpu_custom_call.1} parent=11 // pred_region
          _
        $region48: #{tpu_custom_call.1} parent=11 // pred_fallthru
          _
        // Predicated region
        $region49: #{tpu_custom_call.1} parent=11 // pred_check
          %p381 = pneg %p262
        $region50: #{tpu_custom_call.1} parent=11 // pred_check_branch
          %383 = sbr.rel (%p381) target = $region52
        $region51: #{tpu_custom_call.1} parent=11 // pred_region
          _
        $region52: #{tpu_custom_call.1} parent=11 // pred_fallthru
          _
        // Predicated region
        $region53: #{tpu_custom_call.1} parent=11 // pred_check
          %p384 = pneg %p283
        $region54: #{tpu_custom_call.1} parent=11 // pred_check_branch
          %386 = sbr.rel (%p384) target = $region56
        $region55: #{tpu_custom_call.1} parent=11 // pred_region
          _
        $region56: #{tpu_custom_call.1} parent=11 // pred_fallthru
          _
        // Predicated region
        $region57: #{tpu_custom_call.1} parent=11 // pred_check
          %p387 = pneg %p304
        $region58: #{tpu_custom_call.1} parent=11 // pred_check_branch
          %389 = sbr.rel (%p387) target = $region60
        $region59: #{tpu_custom_call.1} parent=11 // pred_region
          _
        $region60: #{tpu_custom_call.1} parent=11 // pred_fallthru
          _
      $region12: #{tpu_custom_call.1} parent=5 // pred_fallthru
        _
      %p390 = scmp.lt.s32.totalorder %s26, 2
      // Predicated region
      $region61: #{tpu_custom_call.1} parent=5 // pred_check
        %p391 = pneg %p390
      $region62: #{tpu_custom_call.1} parent=5 // pred_check_branch
        %393 = sbr.rel (%p391) target = $region64
      $region63: #{tpu_custom_call.1} parent=5 // pred_region
        // Predicated region
        $region65: #{tpu_custom_call.1} parent=63 // pred_check
          %p394 = pneg %p46
        $region66: #{tpu_custom_call.1} parent=63 // pred_check_branch
          %396 = sbr.rel (%p394) target = $region68
        $region67: #{tpu_custom_call.1} parent=63 // pred_region
          %s397 = sand.u32 %s36, 1
          %s398 = scalar_lea.sflag [#allocation3], %s397
          %s399 = sand.u32 %s36, 1
          %s400 = smul.addr %s399, 8
          %s401 = scalar_lea.vmem [#allocation2], %s400
          %403 = vsyncadd %s398, 0
          %s404 = smul.addr %s26, 8
          %s405 = scalar_lea.hbm %s0, %s404
          %s407 = sshll.u32 %s405, 4
          %s408 = int_to_ptr.hbm [resolvable:$true] %s407
          %s409 = sshll.u32 %s401, 4
          %s410 = int_to_ptr.vmem [resolvable:$true] %s409
          %412 = dma.hbm_to_vmem [thread:$0]  %s408, 128, %s410, %s398
        $region68: #{tpu_custom_call.1} parent=63 // pred_fallthru
          _
      $region64: #{tpu_custom_call.1} parent=5 // pred_fallthru
        _
      %p413 = scmp.le.s32.totalorder 1, %s26
      %p414 = scmp.lt.s32.totalorder %s26, 3
      %p415 = pnand %p413, %p414
      %p416 = pneg %p415
      // Predicated region
      $region69: #{tpu_custom_call.1} parent=5 // pred_check
        _
      $region70: #{tpu_custom_call.1} parent=5 // pred_check_branch
        %418 = sbr.rel (%p415) target = $region72
      $region71: #{tpu_custom_call.1} parent=5 // pred_region
        %s419 = ssub.s32 %s26, 1
        %s420 = sand.u32 %s39, 1
        %s421 = scalar_lea.sflag [#allocation3], %s420
        %s422 = sand.u32 %s39, 1
        %s423 = smul.addr %s422, 8
        %s424 = scalar_lea.vmem [#allocation2], %s423
        // Predicated region
        $region73: #{tpu_custom_call.1} parent=71 // pred_check
          %p425 = pneg %p52
        $region74: #{tpu_custom_call.1} parent=71 // pred_check_branch
          %427 = sbr.rel (%p425) target = $region76
        $region75: #{tpu_custom_call.1} parent=71 // pred_region
          %429 = dma.done %s421, 128
        $region76: #{tpu_custom_call.1} parent=71 // pred_fallthru
          _
        // Predicated region
        $region77: #{tpu_custom_call.1} parent=71 // pred_check
          %p430 = pneg %p73
        $region78: #{tpu_custom_call.1} parent=71 // pred_check_branch
          %432 = sbr.rel (%p430) target = $region80
        $region79: #{tpu_custom_call.1} parent=71 // pred_region
          %434 = dma.done [#allocation6], 16
        $region80: #{tpu_custom_call.1} parent=71 // pred_fallthru
          _
        %s435 = sand.u32 %s39, 1
        %s436 = scalar_lea.sflag [#allocation3], %s435
        %s437 = sand.u32 %s39, 1
        %s438 = smul.addr %s437, 8
        %s439 = scalar_lea.vmem [#allocation2], %s438
        %p440 = pneg %p52
        %p441 = pneg %p49
        %p442 = pneg %p73
        %p443 = pneg %p70
        %p444 = pneg %p94
        %p445 = pneg %p91
        %p446 = pneg %p115
        %p447 = pneg %p112
        %p448 = pneg %p136
        %p449 = pneg %p133
        %p450 = pneg %p157
        %p451 = pneg %p154
        %p452 = pneg %p178
        %p453 = pneg %p175
        %p454 = pneg %p199
        %p455 = pneg %p196
        %p456 = pneg %p220
        %p457 = pneg %p217
        %p458 = pneg %p241
        %p459 = pneg %p238
        %p460 = pneg %p262
        %p461 = pneg %p259
        %p462 = pneg %p283
        %p463 = pneg %p280
        %p464 = pneg %p304
        %p465 = pneg %p301
        %p466 = pneg %p330
        %p467 = pneg %p327
        %s468 = sand.u32 %s317, 1
        %s469 = scalar_lea.sflag [#allocation4], %s468
        %s470 = sand.u32 %s317, 1
        %s471 = smul.addr %s470, 8
        %s472 = scalar_lea.vmem [#allocation7], %s471
        %v473 = vld [vmem:[%s424] sm:$0xff]
        %v474 = vld [vmem:[#allocation5] sm:$0x1]
        %v475 = vld [vmem:[%s2] sm:$0x1]
        %vm476 = vcmask 261120
        %v477 = vsel %vm476, %v473, 0.0
        %478 = vadd.xlane.f32.xlu0 %v477
        %v479 = vpop.xlane.xlu0 %478
        %v480 = vrcp.pop 32.0
        %v481 = vmul.f32 32.0, %v480
        %v482 = vsub.f32 1.0, %v481
        %v483 = vmul.f32 %v480, %v482
        %v484 = vadd.f32 %v480, %v483
        %vm485 = vweird.f32 %v480
        %v486 = vsel %vm485, %v480, %v484
        %v487 = vmul.f32 %v479, %v486
        %v488 = vsub.f32 %v473, %v487
        %v489 = vmul.f32 %v488, %v488
        %v490 = vsel %vm476, %v489, 0.0
        %491 = vadd.xlane.f32.xlu0 %v490
        %v492 = vpop.xlane.xlu0 %491
        %v493 = vmul.f32 %v492, %v486
        %v494 = vadd.f32 %v493, 1e-05
        %v495 = vrsqrt.pop %v494
        %v496 = vmul.f32 %v495, %v494
        %v497 = vmul.f32 %v496, %v495
        %v498 = vmul.f32 0.5, %v497
        %v499 = vsub.f32 1.5, %v498
        %v500 = vmul.f32 %v495, %v499
        %vm501 = vweird.f32 %v494
        %vm502 = vweird.f32 %v495
        %vm503 = vmor %vm501, %vm502
        %v504 = vsel %vm503, %v495, %v500
        %v505 = vmul.f32 %v488, %v504
        %v507 = vperm.slane %v474, 0
        %v509 = vmul.f32 %v505, %v507
        %v511 = vperm.slane %v475, 0
        %v513 = vadd.f32 %v509, %v511
        %v514 = vld [vmem:[%s3] sm:$0xff]
        %v515 = vld [vmem:[%s3 + $0x8] sm:$0xff]
        %v516 = vld [vmem:[%s3 + $0x10] sm:$0xff]
        %v517 = vld [vmem:[%s3 + $0x18] sm:$0xff]
        %v518 = vld [vmem:[%s4] sm:$0x1]
        %v520 = vperm.slane %v518, 0
        %v523 = vsel %vm476, %v513, 0
        %525 = vmatpush.msra.mxu0 0.0
        %526 = vmatpush.msra.mxu0 0.0
        %527 = vmatpush.msra.mxu0 0.0
        %528 = vmatpush.msra.mxu0 0.0
        %529 = vmatpush.msra.mxu0 0.0
        %530 = vmatpush.msra.mxu0 0.0
        %531 = vmatpush.msra.mxu0 0.0
        %532 = vmatpush.msra.mxu0 0.0
        %533 = vmatpush.msra.mxu0 0.0
        %534 = vmatpush.msra.mxu0 0.0
        %535 = vmatpush.msra.mxu0 0.0
        %536 = vmatpush.msra.mxu0 0.0
        %537 = vmatpush.msra.mxu0 %v517
        %538 = vmatpush.msra.mxu0 %v516
        %539 = vmatpush.msra.mxu0 %v515
        %540 = vmatpush.msra.mxu0 %v514
        %541 = vmatmul.f32.gmra.mxu0 %v523
        %v542 = vpop.f32.mrf.mxu0
        %v543 = vadd.f32 %v520, %v542
        %544 = vdwg.mxu0
        %v545 = vld [vmem:[%s5] sm:$0xff]
        %v546 = vld [vmem:[%s5 + $0x8] sm:$0xff]
        %v547 = vld [vmem:[%s5 + $0x10] sm:$0xff]
        %v548 = vld [vmem:[%s5 + $0x18] sm:$0xff]
        %v549 = vmul.f32 %v543, 0.17677669
        %551 = vrot.lane.b32.xlu0 %v543, 96
        %v552 = vpop.permute.xlu0 %551
        %vm553 = vcmask 64512
        %v555 = vsel %vm553, %v549, 0
        %v557 = vsel %vm553, %v552, 0
        %559 = vmatpush.xpose.msra.mxu0 0.0
        %560 = vmatpush.xpose.msra.mxu0 0.0
        %561 = vmatpush.xpose.msra.mxu0 0.0
        %562 = vmatpush.xpose.msra.mxu0 0.0
        %563 = vmatpush.xpose.msra.mxu0 0.0
        %564 = vmatpush.xpose.msra.mxu0 0.0
        %565 = vmatpush.xpose.msra.mxu0 0.0
        %566 = vmatpush.xpose.msra.mxu0 0.0
        %567 = vmatpush.xpose.msra.mxu0 0.0
        %568 = vmatpush.xpose.msra.mxu0 0.0
        %569 = vmatpush.xpose.msra.mxu0 0.0
        %570 = vmatpush.xpose.msra.mxu0 0.0
        %571 = vmatpush.xpose.msra.mxu0 0.0
        %572 = vmatpush.xpose.msra.mxu0 0.0
        %573 = vmatpush.xpose.msra.mxu0 0.0
        %574 = vmatpush.xpose.msra.mxu0 %v557
        %575 = vmatmul.f32.gmra.mxu0 %v555
        %v576 = vpop.f32.mrf.mxu0
        %v577 = vadd.f32 0.0, %v576
        %578 = vdwg.mxu0
        %v579 = vsel %vm553, %v577, -inf
        %580 = vmax.xlane.f32.xlu0 %v579
        %v581 = vpop.xlane.xlu0 %580
        %v582 = vsub.f32 %v577, %v581
        %v583 = vmul.f32 %v582, 1.442695
        %v584 = vpow.pop %v583
        %v585 = vsel %vm553, %v584, 0.0
        %586 = vadd.xlane.f32.xlu0 %v585
        %v587 = vpop.xlane.xlu0 %586
        %v588 = vrcp.pop %v587
        %v589 = vmul.f32 %v587, %v588
        %v590 = vsub.f32 2.0, %v589
        %v591 = vmul.f32 %v588, %v590
        %v592 = vmul.f32 %v584, %v591
        %593 = vrot.lane.b32.xlu0 %v543, 64
        %v594 = vpop.permute.xlu0 %593
        %v597 = vsel %vm553, %v592, 0
        %599 = vmatpush.msra.mxu0 0.0
        %600 = vmatpush.msra.mxu0 0.0
        %601 = vmatpush.msra.mxu0 0.0
        %602 = vmatpush.msra.mxu0 0.0
        %603 = vmatpush.msra.mxu0 0.0
        %604 = vmatpush.msra.mxu0 0.0
        %605 = vmatpush.msra.mxu0 0.0
        %606 = vmatpush.msra.mxu0 0.0
        %607 = vmatpush.msra.mxu0 0.0
        %608 = vmatpush.msra.mxu0 0.0
        %609 = vmatpush.msra.mxu0 0.0
        %610 = vmatpush.msra.mxu0 0.0
        %611 = vmatpush.msra.mxu0 0.0
        %612 = vmatpush.msra.mxu0 0.0
        %613 = vmatpush.msra.mxu0 0.0
        %614 = vmatpush.msra.mxu0 %v594
        %615 = vmatmul.f32.gmra.mxu0 %v597
        %v616 = vpop.f32.mrf.mxu0
        %v617 = vadd.f32 0.0, %v616
        %618 = vdwg.mxu0
        %619 = vrot.lane.b32.xlu0 %v549, 120
        %v620 = vpop.permute.xlu0 %619
        %621 = vrot.lane.b32.xlu0 %v543, 88
        %v622 = vpop.permute.xlu0 %621
        %v623 = vsel %vm553, %v620, 0
        %v625 = vsel %vm553, %v622, 0
        %627 = vmatpush.xpose.msra.mxu0 0.0
        %628 = vmatpush.xpose.msra.mxu0 0.0
        %629 = vmatpush.xpose.msra.mxu0 0.0
        %630 = vmatpush.xpose.msra.mxu0 0.0
        %631 = vmatpush.xpose.msra.mxu0 0.0
        %632 = vmatpush.xpose.msra.mxu0 0.0
        %633 = vmatpush.xpose.msra.mxu0 0.0
        %634 = vmatpush.xpose.msra.mxu0 0.0
        %635 = vmatpush.xpose.msra.mxu0 0.0
        %636 = vmatpush.xpose.msra.mxu0 0.0
        %637 = vmatpush.xpose.msra.mxu0 0.0
        %638 = vmatpush.xpose.msra.mxu0 0.0
        %639 = vmatpush.xpose.msra.mxu0 0.0
        %640 = vmatpush.xpose.msra.mxu0 0.0
        %641 = vmatpush.xpose.msra.mxu0 0.0
        %642 = vmatpush.xpose.msra.mxu0 %v625
        %643 = vmatmul.f32.gmra.mxu0 %v623
        %v644 = vpop.f32.mrf.mxu0
        %v645 = vadd.f32 0.0, %v644
        %646 = vdwg.mxu0
        %v647 = vsel %vm553, %v645, -inf
        %648 = vmax.xlane.f32.xlu0 %v647
        %v649 = vpop.xlane.xlu0 %648
        %v650 = vsub.f32 %v645, %v649
        %v651 = vmul.f32 %v650, 1.442695
        %v652 = vpow.pop %v651
        %v653 = vsel %vm553, %v652, 0.0
        %654 = vadd.xlane.f32.xlu0 %v653
        %v655 = vpop.xlane.xlu0 %654
        %v656 = vrcp.pop %v655
        %v657 = vmul.f32 %v655, %v656
        %v658 = vsub.f32 2.0, %v657
        %v659 = vmul.f32 %v656, %v658
        %v660 = vmul.f32 %v652, %v659
        %661 = vrot.lane.b32.xlu0 %v543, 56
        %v662 = vpop.permute.xlu0 %661
        %v665 = vsel %vm553, %v660, 0
        %667 = vmatpush.msra.mxu0 0.0
        %668 = vmatpush.msra.mxu0 0.0
        %669 = vmatpush.msra.mxu0 0.0
        %670 = vmatpush.msra.mxu0 0.0
        %671 = vmatpush.msra.mxu0 0.0
        %672 = vmatpush.msra.mxu0 0.0
        %673 = vmatpush.msra.mxu0 0.0
        %674 = vmatpush.msra.mxu0 0.0
        %675 = vmatpush.msra.mxu0 0.0
        %676 = vmatpush.msra.mxu0 0.0
        %677 = vmatpush.msra.mxu0 0.0
        %678 = vmatpush.msra.mxu0 0.0
        %679 = vmatpush.msra.mxu0 0.0
        %680 = vmatpush.msra.mxu0 0.0
        %681 = vmatpush.msra.mxu0 0.0
        %682 = vmatpush.msra.mxu0 %v662
        %683 = vmatmul.f32.gmra.mxu0 %v665
        %v684 = vpop.f32.mrf.mxu0
        %v685 = vadd.f32 0.0, %v684
        %686 = vdwg.mxu0
        %v688 = vsel %vm553, %v685, 0
        %690 = vmatpush.msra.mxu0 0.0
        %691 = vmatpush.msra.mxu0 0.0
        %692 = vmatpush.msra.mxu0 0.0
        %693 = vmatpush.msra.mxu0 0.0
        %694 = vmatpush.msra.mxu0 0.0
        %695 = vmatpush.msra.mxu0 0.0
        %696 = vmatpush.msra.mxu0 0.0
        %697 = vmatpush.msra.mxu0 0.0
        %698 = vmatpush.msra.mxu0 0.0
        %699 = vmatpush.msra.mxu0 0.0
        %700 = vmatpush.msra.mxu0 0.0
        %701 = vmatpush.msra.mxu0 0.0
        %702 = vmatpush.msra.mxu0 0.0
        %703 = vmatpush.msra.mxu0 0.0
        %704 = vmatpush.msra.mxu0 0.0
        %705 = vmatpush.msra.mxu0 %v546
        %706 = vmatmul.f32.gmra.mxu0 %v688
        %v707 = vpop.f32.mrf.mxu0
        %v708 = vadd.f32 0.0, %v707
        %709 = vdwg.mxu0
        %v711 = vsel %vm553, %v617, 0
        %713 = vmatpush.msra.mxu0 0.0
        %714 = vmatpush.msra.mxu0 0.0
        %715 = vmatpush.msra.mxu0 0.0
        %716 = vmatpush.msra.mxu0 0.0
        %717 = vmatpush.msra.mxu0 0.0
        %718 = vmatpush.msra.mxu0 0.0
        %719 = vmatpush.msra.mxu0 0.0
        %720 = vmatpush.msra.mxu0 0.0
        %721 = vmatpush.msra.mxu0 0.0
        %722 = vmatpush.msra.mxu0 0.0
        %723 = vmatpush.msra.mxu0 0.0
        %724 = vmatpush.msra.mxu0 0.0
        %725 = vmatpush.msra.mxu0 0.0
        %726 = vmatpush.msra.mxu0 0.0
        %727 = vmatpush.msra.mxu0 0.0
        %728 = vmatpush.msra.mxu0 %v545
        %729 = vmatmul.f32.gmra.mxu0 %v711
        %v730 = vpop.f32.mrf.mxu0
        %v731 = vadd.f32 %v708, %v730
        %732 = vdwg.mxu0
        %733 = vrot.lane.b32.xlu0 %v549, 112
        %v734 = vpop.permute.xlu0 %733
        %735 = vrot.lane.b32.xlu0 %v543, 80
        %v736 = vpop.permute.xlu0 %735
        %v737 = vsel %vm553, %v734, 0
        %v739 = vsel %vm553, %v736, 0
        %741 = vmatpush.xpose.msra.mxu0 0.0
        %742 = vmatpush.xpose.msra.mxu0 0.0
        %743 = vmatpush.xpose.msra.mxu0 0.0
        %744 = vmatpush.xpose.msra.mxu0 0.0
        %745 = vmatpush.xpose.msra.mxu0 0.0
        %746 = vmatpush.xpose.msra.mxu0 0.0
        %747 = vmatpush.xpose.msra.mxu0 0.0
        %748 = vmatpush.xpose.msra.mxu0 0.0
        %749 = vmatpush.xpose.msra.mxu0 0.0
        %750 = vmatpush.xpose.msra.mxu0 0.0
        %751 = vmatpush.xpose.msra.mxu0 0.0
        %752 = vmatpush.xpose.msra.mxu0 0.0
        %753 = vmatpush.xpose.msra.mxu0 0.0
        %754 = vmatpush.xpose.msra.mxu0 0.0
        %755 = vmatpush.xpose.msra.mxu0 0.0
        %756 = vmatpush.xpose.msra.mxu0 %v739
        %757 = vmatmul.f32.gmra.mxu0 %v737
        %v758 = vpop.f32.mrf.mxu0
        %v759 = vadd.f32 0.0, %v758
        %760 = vdwg.mxu0
        %v761 = vsel %vm553, %v759, -inf
        %762 = vmax.xlane.f32.xlu0 %v761
        %v763 = vpop.xlane.xlu0 %762
        %v764 = vsub.f32 %v759, %v763
        %v765 = vmul.f32 %v764, 1.442695
        %v766 = vpow.pop %v765
        %v767 = vsel %vm553, %v766, 0.0
        %768 = vadd.xlane.f32.xlu0 %v767
        %v769 = vpop.xlane.xlu0 %768
        %v770 = vrcp.pop %v769
        %v771 = vmul.f32 %v769, %v770
        %v772 = vsub.f32 2.0, %v771
        %v773 = vmul.f32 %v770, %v772
        %v774 = vmul.f32 %v766, %v773
        %775 = vrot.lane.b32.xlu0 %v543, 48
        %v776 = vpop.permute.xlu0 %775
        %v779 = vsel %vm553, %v774, 0
        %781 = vmatpush.msra.mxu0 0.0
        %782 = vmatpush.msra.mxu0 0.0
        %783 = vmatpush.msra.mxu0 0.0
        %784 = vmatpush.msra.mxu0 0.0
        %785 = vmatpush.msra.mxu0 0.0
        %786 = vmatpush.msra.mxu0 0.0
        %787 = vmatpush.msra.mxu0 0.0
        %788 = vmatpush.msra.mxu0 0.0
        %789 = vmatpush.msra.mxu0 0.0
        %790 = vmatpush.msra.mxu0 0.0
        %791 = vmatpush.msra.mxu0 0.0
        %792 = vmatpush.msra.mxu0 0.0
        %793 = vmatpush.msra.mxu0 0.0
        %794 = vmatpush.msra.mxu0 0.0
        %795 = vmatpush.msra.mxu0 0.0
        %796 = vmatpush.msra.mxu0 %v776
        %797 = vmatmul.f32.gmra.mxu0 %v779
        %v798 = vpop.f32.mrf.mxu0
        %v799 = vadd.f32 0.0, %v798
        %800 = vdwg.mxu0
        %v802 = vsel %vm553, %v799, 0
        %804 = vmatpush.msra.mxu0 0.0
        %805 = vmatpush.msra.mxu0 0.0
        %806 = vmatpush.msra.mxu0 0.0
        %807 = vmatpush.msra.mxu0 0.0
        %808 = vmatpush.msra.mxu0 0.0
        %809 = vmatpush.msra.mxu0 0.0
        %810 = vmatpush.msra.mxu0 0.0
        %811 = vmatpush.msra.mxu0 0.0
        %812 = vmatpush.msra.mxu0 0.0
        %813 = vmatpush.msra.mxu0 0.0
        %814 = vmatpush.msra.mxu0 0.0
        %815 = vmatpush.msra.mxu0 0.0
        %816 = vmatpush.msra.mxu0 0.0
        %817 = vmatpush.msra.mxu0 0.0
        %818 = vmatpush.msra.mxu0 0.0
        %819 = vmatpush.msra.mxu0 %v547
        %820 = vmatmul.f32.gmra.mxu0 %v802
        %v821 = vpop.f32.mrf.mxu0
        %v822 = vadd.f32 0.0, %v821
        %823 = vdwg.mxu0
        %v824 = vadd.f32 %v731, %v822
        %825 = vrot.lane.b32.xlu0 %v549, 104
        %v826 = vpop.permute.xlu0 %825
        %827 = vrot.lane.b32.xlu0 %v543, 72
        %v828 = vpop.permute.xlu0 %827
        %v829 = vsel %vm553, %v826, 0
        %v831 = vsel %vm553, %v828, 0
        %833 = vmatpush.xpose.msra.mxu0 0.0
        %834 = vmatpush.xpose.msra.mxu0 0.0
        %835 = vmatpush.xpose.msra.mxu0 0.0
        %836 = vmatpush.xpose.msra.mxu0 0.0
        %837 = vmatpush.xpose.msra.mxu0 0.0
        %838 = vmatpush.xpose.msra.mxu0 0.0
        %839 = vmatpush.xpose.msra.mxu0 0.0
        %840 = vmatpush.xpose.msra.mxu0 0.0
        %841 = vmatpush.xpose.msra.mxu0 0.0
        %842 = vmatpush.xpose.msra.mxu0 0.0
        %843 = vmatpush.xpose.msra.mxu0 0.0
        %844 = vmatpush.xpose.msra.mxu0 0.0
        %845 = vmatpush.xpose.msra.mxu0 0.0
        %846 = vmatpush.xpose.msra.mxu0 0.0
        %847 = vmatpush.xpose.msra.mxu0 0.0
        %848 = vmatpush.xpose.msra.mxu0 %v831
        %849 = vmatmul.f32.gmra.mxu0 %v829
        %v850 = vpop.f32.mrf.mxu0
        %v851 = vadd.f32 0.0, %v850
        %852 = vdwg.mxu0
        %v853 = vsel %vm553, %v851, -inf
        %854 = vmax.xlane.f32.xlu0 %v853
        %v855 = vpop.xlane.xlu0 %854
        %v856 = vsub.f32 %v851, %v855
        %v857 = vmul.f32 %v856, 1.442695
        %v858 = vpow.pop %v857
        %v859 = vsel %vm553, %v858, 0.0
        %860 = vadd.xlane.f32.xlu0 %v859
        %v861 = vpop.xlane.xlu0 %860
        %v862 = vrcp.pop %v861
        %v863 = vmul.f32 %v861, %v862
        %v864 = vsub.f32 2.0, %v863
        %v865 = vmul.f32 %v862, %v864
        %v866 = vmul.f32 %v858, %v865
        %867 = vrot.lane.b32.xlu0 %v543, 40
        %v868 = vpop.permute.xlu0 %867
        %v871 = vsel %vm553, %v866, 0
        %873 = vmatpush.msra.mxu0 0.0
        %874 = vmatpush.msra.mxu0 0.0
        %875 = vmatpush.msra.mxu0 0.0
        %876 = vmatpush.msra.mxu0 0.0
        %877 = vmatpush.msra.mxu0 0.0
        %878 = vmatpush.msra.mxu0 0.0
        %879 = vmatpush.msra.mxu0 0.0
        %880 = vmatpush.msra.mxu0 0.0
        %881 = vmatpush.msra.mxu0 0.0
        %882 = vmatpush.msra.mxu0 0.0
        %883 = vmatpush.msra.mxu0 0.0
        %884 = vmatpush.msra.mxu0 0.0
        %885 = vmatpush.msra.mxu0 0.0
        %886 = vmatpush.msra.mxu0 0.0
        %887 = vmatpush.msra.mxu0 0.0
        %888 = vmatpush.msra.mxu0 %v868
        %889 = vmatmul.f32.gmra.mxu0 %v871
        %v890 = vpop.f32.mrf.mxu0
        %v891 = vadd.f32 0.0, %v890
        %892 = vdwg.mxu0
        %v894 = vsel %vm553, %v891, 0
        %896 = vmatpush.msra.mxu0 0.0
        %897 = vmatpush.msra.mxu0 0.0
        %898 = vmatpush.msra.mxu0 0.0
        %899 = vmatpush.msra.mxu0 0.0
        %900 = vmatpush.msra.mxu0 0.0
        %901 = vmatpush.msra.mxu0 0.0
        %902 = vmatpush.msra.mxu0 0.0
        %903 = vmatpush.msra.mxu0 0.0
        %904 = vmatpush.msra.mxu0 0.0
        %905 = vmatpush.msra.mxu0 0.0
        %906 = vmatpush.msra.mxu0 0.0
        %907 = vmatpush.msra.mxu0 0.0
        %908 = vmatpush.msra.mxu0 0.0
        %909 = vmatpush.msra.mxu0 0.0
        %910 = vmatpush.msra.mxu0 0.0
        %911 = vmatpush.msra.mxu0 %v548
        %912 = vmatmul.f32.gmra.mxu0 %v894
        %v913 = vpop.f32.mrf.mxu0
        %v914 = vadd.f32 0.0, %v913
        %915 = vdwg.mxu0
        %v916 = vadd.f32 %v824, %v914
        %v917 = vld [vmem:[%s6] sm:$0x1]
        %v919 = vperm.slane %v917, 0
        %v921 = vadd.f32 %v916, %v919
        %v922 = vadd.f32 %v921, %v473
        %v923 = vld [vmem:[%s7] sm:$0x1]
        %v924 = vld [vmem:[%s8] sm:$0x1]
        %v925 = vsel %vm476, %v922, 0.0
        %926 = vadd.xlane.f32.xlu0 %v925
        %v927 = vpop.xlane.xlu0 %926
        %v928 = vmul.f32 %v927, %v486
        %v929 = vsub.f32 %v922, %v928
        %v930 = vmul.f32 %v929, %v929
        %v931 = vsel %vm476, %v930, 0.0
        %932 = vadd.xlane.f32.xlu0 %v931
        %v933 = vpop.xlane.xlu0 %932
        %v934 = vmul.f32 %v933, %v486
        %v935 = vadd.f32 %v934, 1e-05
        %v936 = vrsqrt.pop %v935
        %v937 = vmul.f32 %v936, %v935
        %v938 = vmul.f32 %v937, %v936
        %v939 = vmul.f32 0.5, %v938
        %v940 = vsub.f32 1.5, %v939
        %v941 = vmul.f32 %v936, %v940
        %vm942 = vweird.f32 %v935
        %vm943 = vweird.f32 %v936
        %vm944 = vmor %vm942, %vm943
        %v945 = vsel %vm944, %v936, %v941
        %v946 = vmul.f32 %v929, %v945
        %v948 = vperm.slane %v923, 0
        %v950 = vmul.f32 %v946, %v948
        %v952 = vperm.slane %v924, 0
        %v954 = vadd.f32 %v950, %v952
        %v955 = vld [vmem:[%s9] sm:$0xff]
        %v956 = vld [vmem:[%s9 + $0x8] sm:$0xff]
        %v957 = vld [vmem:[%s9 + $0x10] sm:$0xff]
        %v958 = vld [vmem:[%s9 + $0x18] sm:$0xff]
        %v959 = vld [vmem:[%s10] sm:$0x1]
        %v961 = vperm.slane %v959, 0
        %v964 = vsel %vm476, %v954, 0
        %966 = vmatpush.msra.mxu0 0.0
        %967 = vmatpush.msra.mxu0 0.0
        %968 = vmatpush.msra.mxu0 0.0
        %969 = vmatpush.msra.mxu0 0.0
        %970 = vmatpush.msra.mxu0 0.0
        %971 = vmatpush.msra.mxu0 0.0
        %972 = vmatpush.msra.mxu0 0.0
        %973 = vmatpush.msra.mxu0 0.0
        %974 = vmatpush.msra.mxu0 0.0
        %975 = vmatpush.msra.mxu0 0.0
        %976 = vmatpush.msra.mxu0 0.0
        %977 = vmatpush.msra.mxu0 0.0
        %978 = vmatpush.msra.mxu0 %v958
        %979 = vmatpush.msra.mxu0 %v957
        %980 = vmatpush.msra.mxu0 %v956
        %981 = vmatpush.msra.mxu0 %v955
        %982 = vmatmul.f32.gmra.mxu0 %v964
        %v983 = vpop.f32.mrf.mxu0
        %v984 = vadd.f32 %v961, %v983
        %985 = vdwg.mxu0
        %v986 = vmul.f32 %v984, 0.5
        %v987 = vmul.f32 %v984, 0.044715
        %v988 = vmul.f32 %v987, %v984
        %v989 = vmul.f32 %v988, %v984
        %v990 = vadd.f32 %v984, %v989
        %v991 = vmul.f32 %v990, 0.7978846
        %v992 = vtanh.pop %v991
        %v993 = vadd.f32 %v992, 1.0
        %v994 = vmul.f32 %v986, %v993
        %v995 = vld [vmem:[%s11] sm:$0xff]
        %v996 = vld [vmem:[%s11 + $0x8] sm:$0xff]
        %v997 = vld [vmem:[%s11 + $0x10] sm:$0xff]
        %v998 = vld [vmem:[%s11 + $0x18] sm:$0xff]
        %v999 = vld [vmem:[%s11 + $0x20] sm:$0xff]
        %v1000 = vld [vmem:[%s11 + $0x28] sm:$0xff]
        %v1001 = vld [vmem:[%s11 + $0x30] sm:$0xff]
        %v1002 = vld [vmem:[%s11 + $0x38] sm:$0xff]
        %v1003 = vld [vmem:[%s12] sm:$0x1]
        %v1005 = vperm.slane %v1003, 0
        %vm1007 = vcmask 523264
        %v1009 = vsel %vm1007, %v994, 0
        %1011 = vmatpush.msra.mxu0 0.0
        %1012 = vmatpush.msra.mxu0 0.0
        %1013 = vmatpush.msra.mxu0 0.0
        %1014 = vmatpush.msra.mxu0 0.0
        %1015 = vmatpush.msra.mxu0 0.0
        %1016 = vmatpush.msra.mxu0 0.0
        %1017 = vmatpush.msra.mxu0 0.0
        %1018 = vmatpush.msra.mxu0 0.0
        %1019 = vmatpush.msra.mxu0 %v1002
        %1020 = vmatpush.msra.mxu0 %v1001
        %1021 = vmatpush.msra.mxu0 %v1000
        %1022 = vmatpush.msra.mxu0 %v999
        %1023 = vmatpush.msra.mxu0 %v998
        %1024 = vmatpush.msra.mxu0 %v997
        %1025 = vmatpush.msra.mxu0 %v996
        %1026 = vmatpush.msra.mxu0 %v995
        %1027 = vmatmul.f32.gmra.mxu0 %v1009
        %v1028 = vpop.f32.mrf.mxu0
        %v1029 = vadd.f32 %v1005, %v1028
        %1030 = vdwg.mxu0
        %v1031 = vadd.f32 %v1029, %v922
        %1032 = vst.msk [vmem:[%s472] sm:$0xff] %vm476, %v1031
        %s1033 = sand.u32 %s317, 1
        %s1034 = scalar_lea.sflag [#allocation4], %s1033
        %s1035 = sand.u32 %s317, 1
        %s1036 = smul.addr %s1035, 8
        %s1037 = scalar_lea.vmem [#allocation7], %s1036
        // Predicated region
        $region81: #{tpu_custom_call.1} parent=71 // pred_check
          %p1038 = pneg %p327
        $region82: #{tpu_custom_call.1} parent=71 // pred_check_branch
          %1040 = sbr.rel (%p1038) target = $region84
        $region83: #{tpu_custom_call.1} parent=71 // pred_region
          %1042 = vsyncadd %s1034, 0
          %s1043 = smul.addr %s31, 8
          %s1044 = scalar_lea.hbm %s13, %s1043
          %s1046 = sshll.u32 %s1037, 4
          %s1047 = int_to_ptr.vmem [resolvable:$true] %s1046
          %s1048 = sshll.u32 %s1044, 4
          %s1049 = int_to_ptr.hbm [resolvable:$true] %s1048
          %1051 = dma.vmem_to_hbm [thread:$0]  %s1047, 128, %s1049, %s1034
        $region84: #{tpu_custom_call.1} parent=71 // pred_fallthru
          _
      $region72: #{tpu_custom_call.1} parent=5 // pred_fallthru
        _
      %p1052 = scmp.le.s32.totalorder 2, %s26
      // Predicated region
      $region85: #{tpu_custom_call.1} parent=5 // pred_check
        %p1053 = pneg %p1052
      $region86: #{tpu_custom_call.1} parent=5 // pred_check_branch
        %1055 = sbr.rel (%p1053) target = $region88
      $region87: #{tpu_custom_call.1} parent=5 // pred_region
        %s1056 = ssub.s32 %s26, 2
        // Predicated region
        $region89: #{tpu_custom_call.1} parent=87 // pred_check
          %p1057 = pneg %p333
        $region90: #{tpu_custom_call.1} parent=87 // pred_check_branch
          %1059 = sbr.rel (%p1057) target = $region92
        $region91: #{tpu_custom_call.1} parent=87 // pred_region
          %s1060 = sand.u32 %s318, 1
          %s1061 = scalar_lea.sflag [#allocation4], %s1060
          %s1062 = sand.u32 %s318, 1
          %s1063 = smul.addr %s1062, 8
          %s1064 = scalar_lea.vmem [#allocation7], %s1063
          %1066 = dma.done %s1061, 128
        $region92: #{tpu_custom_call.1} parent=87 // pred_fallthru
          _
      $region88: #{tpu_custom_call.1} parent=5 // pred_fallthru
        _
    $region6: #{tpu_custom_call.1} parent=1 // loop_footer
      %s30 = sadd.s32 1, %s26
    $region7: #{tpu_custom_call.1} parent=1 // loop_footer_branch
      %25 = sbr.rel target = $region3
    $region8: #{tpu_custom_call.1} parent=1 // loop_exit
      _
    %1067 = vsyncpa [#allocation3], 1
    %s1068 = scalar_lea.sflag [#allocation3], 1
    %1069 = vsyncpa %s1068, 1
    %1070 = vsyncpa [#allocation6], 1
    %1071 = vsyncpa [#allocation4], 1
    %s1072 = scalar_lea.sflag [#allocation4], 1
    %1073 = vsyncpa %s1072, 1

</llo_original>
